<compile_context>
chip_gen: v5e
topology: v5e:2x2
jax: 0.10.0
libtpu: 0.0.40
codegen_flags: <defaults>
</compile_context>

<pallas_src>
import functools
import math

import numpy as np
import jax
import jax.numpy as jnp
from jax import lax
from jax.experimental import pallas as pl
from jax.experimental.pallas import tpu as pltpu

ALPHA = 0.2
ACT_GAIN = math.sqrt(2.0)
ACT_CLAMP = 256.0

# upfirdn2d.setup_filter([1,3,3,1]): separable outer product, normalized to sum 1.
_f1 = np.array([1.0, 3.0, 3.0, 1.0], dtype=np.float64)
_FIR_NP = np.outer(_f1, _f1)
_FIR_NP = (_FIR_NP / _FIR_NP.sum()).astype(np.float32)


def _lrelu_agc(x):
    """lrelu_agc(alpha=0.2, gain=sqrt_2, clamp=256) at forward gain=1."""
    x = jnp.where(x >= 0.0, x, ALPHA * x)
    x = x * ACT_GAIN
    return jnp.clip(x, -ACT_CLAMP, ACT_CLAMP)


# ----------------------------- in-kernel helpers (register-only) -----------------------------

def _shift_flat(x, s):
    """value[:, p] = x[:, p + s], zero-extended outside [0, n).  x: (C, n), s static."""
    c, n = x.shape
    if s == 0:
        return x
    if s > 0:
        return jnp.concatenate([x[:, s:], jnp.zeros((c, s), jnp.float32)], axis=1)
    return jnp.concatenate([jnp.zeros((c, -s), jnp.float32), x[:, :n + s]], axis=1)


def _im2col_3x3_flat(x, row_w):
    """im2col patch of a 3x3 / stride-1 / pad-1 conv, built in registers.

    x: (C, H*row_w) with pixels flattened row-major on the lane axis (row width =
    row_w, a power of two).  Returns (9*C, H*row_w): rows ordered (dy, dx, c).
    Row-wrap at the image border is handled by killing the input column that a
    horizontally out-of-range tap would (wrongly) read; vertical out-of-range taps
    fall off the flat axis and read the zero extension.
    """
    c, n = x.shape
    col = lax.broadcasted_iota(jnp.int32, (1, n), 1) & (row_w - 1)
    kill_last = jnp.where(col == row_w - 1, 0.0, 1.0).astype(jnp.float32)   # dx == 0
    kill_first = jnp.where(col == 0, 0.0, 1.0).astype(jnp.float32)          # dx == 2
    xm = (x * kill_last, x, x * kill_first)
    slabs = []
    for dy in range(3):
        for dx in range(3):
            slabs.append(_shift_flat(xm[dx], (dy - 1) * row_w + (dx - 1)))
    return jnp.concatenate(slabs, axis=0)


def _mm_bias_act(wmat, patch):
    """(Cout, K+1) @ concat([patch (K, n); ones (1, n)]) -> lrelu_agc.  Bias = last col."""
    ones = jnp.ones((1, patch.shape[1]), jnp.float32)
    p = jnp.concatenate([patch, ones], axis=0)
    y = jnp.dot(wmat, p, preferred_element_type=jnp.float32)
    return _lrelu_agc(y)


# ----------------------------- fused Pallas kernel -----------------------------

def _make_encoder_kernel(plan):
    """plan: tuple per block of
         (res, down, cin, cout, rgb_slot, conv1_slot, phase_sel_slot, conv2_slot)
       where each slot is (row_offset, rows, cols) into the packed weight blob
       (or None).  Everything static."""

    def kernel(img_ref, blob_ref, x_ref, *feat_refs):
        def read(slot):
            off, rows, cols = slot
            return blob_ref[off:off + rows, 0:cols]

        img = img_ref[0]                                  # (ic_n, H0*W0), lane-flat
        x = None
        for bi, (res, down, cin, cout, rgb_s, c1_s, s_s, c2_s) in enumerate(plan):
            n = res * res
            if rgb_s is not None:                         # fromrgb: 1x1 conv on img
                y = _mm_bias_act(read(rgb_s), img)
                x = y if x is None else x + y
            # conv1: 3x3 / stride 1 / pad 1
            feat = _mm_bias_act(read(c1_s), _im2col_3x3_flat(x, res))
            feat_refs[bi][...] = feat.reshape(1, cin, n)  # lane-dense store
            # conv2
            if down == 2:
                # FIR+3x3/stride2 pre-composed into 6x6/stride2 == 4 phase images,
                # each 3x3/stride1 convolved.  Phase de-interleave = one 0/1 matmul.
                no = n // 4
                phases = jnp.dot(feat, read(s_s),
                                 preferred_element_type=jnp.float32)     # (cin, 4*no)
                slabs = [_im2col_3x3_flat(phases[:, p * no:(p + 1) * no], res // 2)
                         for p in range(4)]
                x = _mm_bias_act(read(c2_s), jnp.concatenate(slabs, axis=0))
            else:
                x = _mm_bias_act(read(c2_s), _im2col_3x3_flat(feat, res))
        x_ref[...] = x.reshape((1,) + x.shape)

    return kernel


# ----------------------------- weight preprocessing (runs once, numpy) -----------------------------

def _demod_np(w):
    w = np.asarray(w, np.float32)
    scale = 1.0 / np.sqrt(np.sum(np.square(w), axis=(1, 2, 3)) + 1e-8)
    return (w * scale[:, None, None, None]).astype(np.float32)


def _compose_fir_3x3_np(w3, fir):
    """Compose the depthwise 4x4 FIR (applied first, pad 2) with a 3x3 stride-2 conv
    into a dense 6x6 stride-2 conv.  (FIR is symmetric, so no flip needed.)"""
    co, ci = w3.shape[0], w3.shape[1]
    w6 = np.zeros((co, ci, 6, 6), np.float32)
    for dy in range(3):
        for dx in range(3):
            w6[:, :, dy:dy + 4, dx:dx + 4] += w3[:, :, dy, dx][:, :, None, None] * fir
    return w6


def _phase_select_matrix(h, w):
    """S[q, ph*HoWo + a*Wo + b] = 1 iff q == (2a+pi)*w + (2b+pj), ph = pi*2 + pj."""
    ho, wo = h // 2, w // 2
    s = np.zeros((h * w, 4 * ho * wo), np.float32)
    for pi in range(2):
        for pj in range(2):
            ph = pi * 2 + pj
            for a in range(ho):
                for b in range(wo):
                    q = (2 * a + pi) * w + (2 * b + pj)
                    s[q, ph * ho * wo + a * wo + b] = 1.0
    return s


def prepare_encoder(blocks):
    """Demodulate weights, fold the FIR into the down=2 convs, reorder to the
    channel-major matmul layout, append biases as a trailing column, and pack
    everything (plus the phase-selection matrices) into ONE f32 blob."""
    mats = []

    def add(m):
        mats.append(np.asarray(m, np.float32))
        return len(mats) - 1

    raw_plan = []
    for blk in blocks:
        res = int(blk['res'])
        down = int(blk['down'])
        cin = int(blk['conv1']['w'].shape[1])
        cout = int(blk['conv2']['w'].shape[0])

        rgb_idx = None
        if blk['fromrgb'] is not None:
            w = _demod_np(blk['fromrgb']['w'])                  # (cin, ic_n, 1, 1)
            b = np.asarray(blk['fromrgb']['b'], np.float32)
            rgb_idx = add(np.concatenate([w[:, :, 0, 0], b[:, None]], axis=1))

        w1 = _demod_np(blk['conv1']['w'])                       # (cin, cin, 3, 3)
        b1 = np.asarray(blk['conv1']['b'], np.float32)
        m1 = np.concatenate(
            [w1.transpose(0, 2, 3, 1).reshape(cin, 9 * cin), b1[:, None]], axis=1)
        c1_idx = add(m1)

        w2 = _demod_np(blk['conv2']['w'])                       # (cout, cin, 3, 3)
        b2 = np.asarray(blk['conv2']['b'], np.float32)
        s_idx = None
        if down == 2:
            w6 = _compose_fir_3x3_np(w2, _FIR_NP)               # (cout, cin, 6, 6)
            t = w6.transpose(0, 2, 3, 1)                        # (cout, u, v, cin)
            t = t.reshape(cout, 3, 2, 3, 2, cin)                # u=(dy,pi), v=(dx,pj)
            t = t.transpose(0, 2, 4, 1, 3, 5)                   # (cout, pi, pj, dy, dx, cin)
            m2 = np.concatenate([t.reshape(cout, 36 * cin), b2[:, None]], axis=1)
            s_idx = add(_phase_select_matrix(res, res))
        else:
            m2 = np.concatenate(
                [w2.transpose(0, 2, 3, 1).reshape(cout, 9 * cin), b2[:, None]], axis=1)
        c2_idx = add(m2)
        raw_plan.append((res, down, cin, cout, rgb_idx, c1_idx, s_idx, c2_idx))

    # Pack into one blob; every matrix starts at a sublane-aligned (mult-of-8) row.
    width = max(m.shape[1] for m in mats)
    width = ((width + 127) // 128) * 128
    offs = []
    r = 0
    for m in mats:
        offs.append(r)
        r += ((m.shape[0] + 7) // 8) * 8
    rows = ((r + 7) // 8) * 8
    blob = np.zeros((rows, width), np.float32)
    for m, off in zip(mats, offs):
        blob[off:off + m.shape[0], :m.shape[1]] = m

    def slot(idx):
        if idx is None:
            return None
        return (int(offs[idx]), int(mats[idx].shape[0]), int(mats[idx].shape[1]))

    plan = tuple((res, down, cin, cout, slot(ri), slot(c1), slot(si), slot(c2))
                 for (res, down, cin, cout, ri, c1, si, c2) in raw_plan)
    return plan, jnp.asarray(blob)


# ----------------------------- fused forward pass -----------------------------

@functools.partial(jax.jit, static_argnums=(0,))
def encoder_forward(plan, blob, img_nchw):
    """Returns (x, feats) in NCHW, mirroring Encoder.forward."""
    n, ic_n, h0, w0 = img_nchw.shape
    img = img_nchw.astype(jnp.float32).reshape(n, ic_n, h0 * w0)   # free reshape

    last_res, last_down, _lcin, last_cout = plan[-1][0], plan[-1][1], plan[-1][2], plan[-1][3]
    x_res = last_res // last_down
    x_shape = (n, last_cout, x_res * x_res)
    feat_shapes = [(n, cin, res * res) for (res, _d, cin, _co, *_rest) in plan]

    kernel = _make_encoder_kernel(plan)

    # Advisory cost estimate (helps XLA schedule the tiny custom call).
    flops = 0
    for (res, down, cin, cout, rgb_s, _c1, _s, _c2) in plan:
        npix = res * res
        if rgb_s is not None:
            flops += 2 * npix * ic_n * cin
        flops += 2 * npix * 9 * cin * cin                       # conv1
        if down == 2:
            flops += 2 * npix * cin * npix                      # phase-select matmul
            flops += 2 * (npix // 4) * 36 * cin * cout          # composed 6x6 conv
        else:
            flops += 2 * npix * 9 * cin * cout
    flops *= n
    bytes_accessed = 4 * (img.size + blob.size
                          + int(np.prod(x_shape))
                          + sum(int(np.prod(s)) for s in feat_shapes))

    outs = pl.pallas_call(
        kernel,
        grid=(n,),
        in_specs=[
            pl.BlockSpec((1, ic_n, h0 * w0), lambda i: (i, 0, 0)),
            pl.BlockSpec(blob.shape, lambda i: (0, 0)),          # one packed weight blob
        ],
        out_specs=tuple(
            [pl.BlockSpec((1,) + x_shape[1:], lambda i: (i, 0, 0))]
            + [pl.BlockSpec((1,) + s[1:], lambda i: (i, 0, 0)) for s in feat_shapes]),
        out_shape=tuple(
            [jax.ShapeDtypeStruct(x_shape, jnp.float32)]
            + [jax.ShapeDtypeStruct(s, jnp.float32) for s in feat_shapes]),
        compiler_params=pltpu.CompilerParams(dimension_semantics=("parallel",)),
        cost_estimate=pl.CostEstimate(flops=int(flops), transcendentals=0,
                                      bytes_accessed=int(bytes_accessed)),
    )(img, blob)

    x = outs[0].reshape(n, last_cout, x_res, x_res)               # free reshape
    feats = {plan[i][0]: outs[1 + i].reshape(n, plan[i][2], plan[i][0], plan[i][0])
             for i in range(len(plan))}
    return x, feats


# ----------------------------- synthetic params -----------------------------

def init_conv(key, cin, cout, k):
    # torch.randn weights, zero bias (deterministic synthetic init)
    return {'w': jax.random.normal(key, (cout, cin, k, k), dtype=jnp.float32),
            'b': jnp.zeros((cout,), dtype=jnp.float32)}


def init_encoder(key, resolution=16, ic_n=3, ch_base=64, ch_max=16):
    log2res = int(round(math.log2(resolution)))
    assert 2 ** log2res == resolution
    encode_res = [2 ** i for i in range(log2res, 1, -1)]
    keys = iter(jax.random.split(key, 4 * len(encode_res) + 8))
    blocks = []
    for idx, (resi, resj) in enumerate(zip(encode_res[:-1], encode_res[1:])):
        ci = min(ch_base // resi, ch_max)
        cj = min(ch_base // resj, ch_max)
        blocks.append({
            'res': resi,
            'down': 2,
            'fromrgb': init_conv(next(keys), ic_n, ci, 1) if idx == 0 else None,
            'conv1': init_conv(next(keys), ci, ci, 3),
            'conv2': init_conv(next(keys), ci, cj, 3),
        })
    ch = min(ch_base // encode_res[-1], ch_max)
    blocks.append({
        'res': 4,
        'down': 1,
        'fromrgb': None,
        'conv1': init_conv(next(keys), ch, ch, 3),
        'conv2': init_conv(next(keys), ch, ch, 3),
    })
    return blocks


# ----------------------------- plain-JAX reference -----------------------------

def _demodulate(w):
    scale = jax.lax.rsqrt(jnp.sum(jnp.square(w), axis=(1, 2, 3)) + 1e-8)
    return w * scale[:, None, None, None]


def _ref_conv2d(x, p, k, down, fir):
    w = _demodulate(p['w'])
    dn = ('NCHW', 'OIHW', 'NCHW')
    if down == 1:
        pad = k // 2
        y = lax.conv_general_dilated(x, w, (1, 1), [(pad, pad), (pad, pad)],
                                     dimension_numbers=dn)
    else:
        c = x.shape[1]
        f4 = jnp.tile(fir[None, None, :, :], (c, 1, 1, 1))
        xf = lax.conv_general_dilated(x, f4, (1, 1), [(2, 2), (2, 2)],
                                      dimension_numbers=dn, feature_group_count=c)
        y = lax.conv_general_dilated(xf, w, (2, 2), [(0, 0), (0, 0)],
                                     dimension_numbers=dn)
    y = y + p['b'][None, :, None, None]
    return _lrelu_agc(y)


def reference_forward(blocks, img_nchw):
    fir = jnp.asarray(_FIR_NP)
    img = img_nchw.astype(jnp.float32)
    x = None
    feats = {}
    for blk in blocks:
        if blk['fromrgb'] is not None:
            y = _ref_conv2d(img, blk['fromrgb'], 1, 1, fir)
            x = y if x is None else x + y
        feat = _ref_conv2d(x, blk['conv1'], 3, 1, fir)
        x = _ref_conv2d(feat, blk['conv2'], 3, blk['down'], fir)
        feats[blk['res']] = feat
    return x, feats


if __name__ == "__main__":
    key = jax.random.PRNGKey(0)
    k_params, k_img = jax.random.split(key)

    # Small config consistent with the module: resolution=16, ic_n=3, ch_base=64,
    # ch_max=16 -> channels 4 -> 8 -> 16, spatial 16 -> 8 -> 4.
    blocks = init_encoder(k_params, resolution=16, ic_n=3, ch_base=64, ch_max=16)
    img = jax.random.normal(k_img, (2, 3, 16, 16), dtype=jnp.float32)

    plan, blob = prepare_encoder(blocks)             # one-time weight preprocessing
    x, feats = encoder_forward(plan, blob, img)
    jax.block_until_ready(x)
    jax.block_until_ready(feats)

    assert x.shape == (2, 16, 4, 4), x.shape
    assert feats[16].shape == (2, 4, 16, 16), feats[16].shape
    assert feats[8].shape == (2, 8, 8, 8), feats[8].shape
    assert feats[4].shape == (2, 16, 4, 4), feats[4].shape
    assert bool(jnp.all(jnp.isfinite(x)))

    # Numerical check against a plain-JAX (lax.conv) rendition of the PyTorch module.
    x_ref, feats_ref = reference_forward(blocks, img)
    np.testing.assert_allclose(np.asarray(x), np.asarray(x_ref), rtol=2e-3, atol=2e-3)
    for r in (16, 8, 4):
        np.testing.assert_allclose(np.asarray(feats[r]), np.asarray(feats_ref[r]),
                                   rtol=2e-3, atol=2e-3)

    print("KERNEL_OK")
</pallas_src>

<mosaic_0001>
module attributes {stable_mosaic.version = 11 : i64} {
  func.func @kernel(%arg0: i32, %arg1: memref<1x3x256xf32, #tpu.memory_space<vmem>>, %arg2: memref<400x384xf32, #tpu.memory_space<vmem>>, %arg3: memref<1x16x16xf32, #tpu.memory_space<vmem>>, %arg4: memref<1x4x256xf32, #tpu.memory_space<vmem>>, %arg5: memref<1x8x64xf32, #tpu.memory_space<vmem>>, %arg6: memref<1x16x16xf32, #tpu.memory_space<vmem>>) attributes {dimension_semantics = [#tpu.dimension_semantics<parallel>], iteration_bounds = array<i64: 2>, scalar_prefetch = 0 : i64, scratch_operands = 0 : i64, tpu.core_type = #tpu.core_type<tc>, window_params = [{transform_indices = @transform_0, window_bounds = array<i64: 1, 3, 256>}, {pipeline_mode = #tpu.pipeline_mode<synchronous>, transform_indices = @transform_1, window_bounds = array<i64: 400, 384>}, {transform_indices = @transform_2, window_bounds = array<i64: 1, 16, 16>}, {transform_indices = @transform_3, window_bounds = array<i64: 1, 4, 256>}, {transform_indices = @transform_4, window_bounds = array<i64: 1, 8, 64>}, {transform_indices = @transform_5, window_bounds = array<i64: 1, 16, 16>}]} {
    %c0 = arith.constant 0 : index
    %c0_0 = arith.constant 0 : index
    %c0_1 = arith.constant 0 : index
    %0 = vector.load %arg1[%c0, %c0_0, %c0_1] : memref<1x3x256xf32, #tpu.memory_space<vmem>>, vector<1x3x256xf32>
    %1 = vector.shape_cast %0 : vector<1x3x256xf32> to vector<3x256xf32>
    %c0_2 = arith.constant 0 : index
    %c0_3 = arith.constant 0 : index
    %2 = vector.load %arg2[%c0_2, %c0_3] : memref<400x384xf32, #tpu.memory_space<vmem>>, vector<4x4xf32>
    %cst = arith.constant 1.000000e+00 : f32
    %3 = vector.broadcast %cst : f32 to vector<1x256xf32>
    %4 = tpu.concatenate %1, %3 in 0 : vector<3x256xf32>, vector<1x256xf32> -> vector<4x256xf32>
    %cst_4 = arith.constant dense<0.000000e+00> : vector<4x256xf32>
    %5 = tpu.matmul %2, %4, %cst_4 {dimension_numbers = #tpu.dot_dimension_numbers<[1], [0], [0], [1], [0, 0, 1, 1], [], []>} : vector<4x4xf32>, vector<4x256xf32>, vector<4x256xf32> -> vector<4x256xf32>
    %cst_5 = arith.constant 0.000000e+00 : f32
    %6 = vector.broadcast %cst_5 : f32 to vector<4x256xf32>
    %7 = arith.cmpf oge, %5, %6 : vector<4x256xf32>
    %cst_6 = arith.constant 2.000000e-01 : f32
    %8 = vector.broadcast %cst_6 : f32 to vector<4x256xf32>
    %9 = arith.mulf %8, %5 : vector<4x256xf32>
    %10 = arith.select %7, %5, %9 : vector<4x256xi1>, vector<4x256xf32>
    %cst_7 = arith.constant 1.41421354 : f32
    %11 = vector.broadcast %cst_7 : f32 to vector<4x256xf32>
    %12 = arith.mulf %10, %11 : vector<4x256xf32>
    %cst_8 = arith.constant -2.560000e+02 : f32
    %cst_9 = arith.constant 2.560000e+02 : f32
    %13 = vector.broadcast %cst_8 : f32 to vector<4x256xf32>
    %14 = arith.maximumf %13, %12 : vector<4x256xf32>
    %15 = vector.broadcast %cst_9 : f32 to vector<4x256xf32>
    %16 = arith.minimumf %15, %14 : vector<4x256xf32>
    %c8 = arith.constant 8 : index
    %c0_10 = arith.constant 0 : index
    %17 = vector.load %arg2[%c8, %c0_10] : memref<400x384xf32, #tpu.memory_space<vmem>>, vector<4x37xf32>
    %18 = tpu.iota {dimensions = array<i32: 1>} : vector<1x256xi32>
    %c15_i32 = arith.constant 15 : i32
    %19 = vector.broadcast %c15_i32 : i32 to vector<1x256xi32>
    %20 = arith.andi %18, %19 : vector<1x256xi32>
    %c15_i32_11 = arith.constant 15 : i32
    %21 = vector.broadcast %c15_i32_11 : i32 to vector<1x256xi32>
    %22 = arith.cmpi eq, %20, %21 : vector<1x256xi32>
    %cst_12 = arith.constant 0.000000e+00 : f32
    %cst_13 = arith.constant 1.000000e+00 : f32
    %23 = vector.broadcast %cst_12 : f32 to vector<1x256xf32>
    %24 = vector.broadcast %cst_13 : f32 to vector<1x256xf32>
    %25 = arith.select %22, %23, %24 : vector<1x256xi1>, vector<1x256xf32>
    %c0_i32 = arith.constant 0 : i32
    %26 = vector.broadcast %c0_i32 : i32 to vector<1x256xi32>
    %27 = arith.cmpi eq, %20, %26 : vector<1x256xi32>
    %cst_14 = arith.constant 0.000000e+00 : f32
    %cst_15 = arith.constant 1.000000e+00 : f32
    %28 = vector.broadcast %cst_14 : f32 to vector<1x256xf32>
    %29 = vector.broadcast %cst_15 : f32 to vector<1x256xf32>
    %30 = arith.select %27, %28, %29 : vector<1x256xi1>, vector<1x256xf32>
    %31 = vector.broadcast %25 : vector<1x256xf32> to vector<4x256xf32>
    %32 = arith.mulf %16, %31 : vector<4x256xf32>
    %33 = vector.broadcast %30 : vector<1x256xf32> to vector<4x256xf32>
    %34 = arith.mulf %16, %33 : vector<4x256xf32>
    %cst_16 = arith.constant 0.000000e+00 : f32
    %35 = vector.broadcast %cst_16 : f32 to vector<4x17xf32>
    %36 = vector.extract_strided_slice %32 {offsets = [0, 0], sizes = [4, 239], strides = [1, 1]} : vector<4x256xf32> to vector<4x239xf32>
    %37 = tpu.concatenate %35, %36 in 1 : vector<4x17xf32>, vector<4x239xf32> -> vector<4x256xf32>
    %cst_17 = arith.constant 0.000000e+00 : f32
    %38 = vector.broadcast %cst_17 : f32 to vector<4x16xf32>
    %39 = vector.extract_strided_slice %16 {offsets = [0, 0], sizes = [4, 240], strides = [1, 1]} : vector<4x256xf32> to vector<4x240xf32>
    %40 = tpu.concatenate %38, %39 in 1 : vector<4x16xf32>, vector<4x240xf32> -> vector<4x256xf32>
    %cst_18 = arith.constant 0.000000e+00 : f32
    %41 = vector.broadcast %cst_18 : f32 to vector<4x15xf32>
    %42 = vector.extract_strided_slice %34 {offsets = [0, 0], sizes = [4, 241], strides = [1, 1]} : vector<4x256xf32> to vector<4x241xf32>
    %43 = tpu.concatenate %41, %42 in 1 : vector<4x15xf32>, vector<4x241xf32> -> vector<4x256xf32>
    %cst_19 = arith.constant 0.000000e+00 : f32
    %44 = vector.broadcast %cst_19 : f32 to vector<4x1xf32>
    %45 = vector.extract_strided_slice %32 {offsets = [0, 0], sizes = [4, 255], strides = [1, 1]} : vector<4x256xf32> to vector<4x255xf32>
    %46 = tpu.concatenate %44, %45 in 1 : vector<4x1xf32>, vector<4x255xf32> -> vector<4x256xf32>
    %47 = vector.extract_strided_slice %34 {offsets = [0, 1], sizes = [4, 255], strides = [1, 1]} : vector<4x256xf32> to vector<4x255xf32>
    %cst_20 = arith.constant 0.000000e+00 : f32
    %48 = vector.broadcast %cst_20 : f32 to vector<4x1xf32>
    %49 = tpu.concatenate %47, %48 in 1 : vector<4x255xf32>, vector<4x1xf32> -> vector<4x256xf32>
    %50 = vector.extract_strided_slice %32 {offsets = [0, 15], sizes = [4, 241], strides = [1, 1]} : vector<4x256xf32> to vector<4x241xf32>
    %cst_21 = arith.constant 0.000000e+00 : f32
    %51 = vector.broadcast %cst_21 : f32 to vector<4x15xf32>
    %52 = tpu.concatenate %50, %51 in 1 : vector<4x241xf32>, vector<4x15xf32> -> vector<4x256xf32>
    %53 = vector.extract_strided_slice %16 {offsets = [0, 16], sizes = [4, 240], strides = [1, 1]} : vector<4x256xf32> to vector<4x240xf32>
    %cst_22 = arith.constant 0.000000e+00 : f32
    %54 = vector.broadcast %cst_22 : f32 to vector<4x16xf32>
    %55 = tpu.concatenate %53, %54 in 1 : vector<4x240xf32>, vector<4x16xf32> -> vector<4x256xf32>
    %56 = vector.extract_strided_slice %34 {offsets = [0, 17], sizes = [4, 239], strides = [1, 1]} : vector<4x256xf32> to vector<4x239xf32>
    %cst_23 = arith.constant 0.000000e+00 : f32
    %57 = vector.broadcast %cst_23 : f32 to vector<4x17xf32>
    %58 = tpu.concatenate %56, %57 in 1 : vector<4x239xf32>, vector<4x17xf32> -> vector<4x256xf32>
    %59 = tpu.concatenate %37, %40, %43, %46, %16, %49, %52, %55, %58 in 0 : vector<4x256xf32>, vector<4x256xf32>, vector<4x256xf32>, vector<4x256xf32>, vector<4x256xf32>, vector<4x256xf32>, vector<4x256xf32>, vector<4x256xf32>, vector<4x256xf32> -> vector<36x256xf32>
    %cst_24 = arith.constant 1.000000e+00 : f32
    %60 = vector.broadcast %cst_24 : f32 to vector<1x256xf32>
    %61 = tpu.concatenate %59, %60 in 0 : vector<36x256xf32>, vector<1x256xf32> -> vector<37x256xf32>
    %cst_25 = arith.constant dense<0.000000e+00> : vector<4x256xf32>
    %62 = tpu.matmul %17, %61, %cst_25 {dimension_numbers = #tpu.dot_dimension_numbers<[1], [0], [0], [1], [0, 0, 1, 1], [], []>} : vector<4x37xf32>, vector<37x256xf32>, vector<4x256xf32> -> vector<4x256xf32>
    %cst_26 = arith.constant 0.000000e+00 : f32
    %63 = vector.broadcast %cst_26 : f32 to vector<4x256xf32>
    %64 = arith.cmpf oge, %62, %63 : vector<4x256xf32>
    %cst_27 = arith.constant 2.000000e-01 : f32
    %65 = vector.broadcast %cst_27 : f32 to vector<4x256xf32>
    %66 = arith.mulf %65, %62 : vector<4x256xf32>
    %67 = arith.select %64, %62, %66 : vector<4x256xi1>, vector<4x256xf32>
    %cst_28 = arith.constant 1.41421354 : f32
    %68 = vector.broadcast %cst_28 : f32 to vector<4x256xf32>
    %69 = arith.mulf %67, %68 : vector<4x256xf32>
    %cst_29 = arith.constant -2.560000e+02 : f32
    %cst_30 = arith.constant 2.560000e+02 : f32
    %70 = vector.broadcast %cst_29 : f32 to vector<4x256xf32>
    %71 = arith.maximumf %70, %69 : vector<4x256xf32>
    %72 = vector.broadcast %cst_30 : f32 to vector<4x256xf32>
    %73 = arith.minimumf %72, %71 : vector<4x256xf32>
    %74 = vector.shape_cast %73 : vector<4x256xf32> to vector<1x4x256xf32>
    %c0_31 = arith.constant 0 : index
    %c0_32 = arith.constant 0 : index
    %c0_33 = arith.constant 0 : index
    %75 = vector.load %arg4[%c0_31, %c0_32, %c0_33] : memref<1x4x256xf32, #tpu.memory_space<vmem>>, vector<1x4x256xf32>
    tpu.vector_store %arg4[%c0_31, %c0_32, %c0_33], %74 {strides = array<i32>} : memref<1x4x256xf32, #tpu.memory_space<vmem>>, vector<1x4x256xf32>,
    %c16 = arith.constant 16 : index
    %c0_34 = arith.constant 0 : index
    %76 = vector.load %arg2[%c16, %c0_34] : memref<400x384xf32, #tpu.memory_space<vmem>>, vector<256x256xf32>
    %cst_35 = arith.constant dense<0.000000e+00> : vector<4x256xf32>
    %77 = tpu.matmul %73, %76, %cst_35 {dimension_numbers = #tpu.dot_dimension_numbers<[1], [0], [0], [1], [0, 0, 1, 1], [], []>} : vector<4x256xf32>, vector<256x256xf32>, vector<4x256xf32> -> vector<4x256xf32>
    %78 = vector.extract_strided_slice %77 {offsets = [0, 0], sizes = [4, 64], strides = [1, 1]} : vector<4x256xf32> to vector<4x64xf32>
    %79 = tpu.iota {dimensions = array<i32: 1>} : vector<1x64xi32>
    %c7_i32 = arith.constant 7 : i32
    %80 = vector.broadcast %c7_i32 : i32 to vector<1x64xi32>
    %81 = arith.andi %79, %80 : vector<1x64xi32>
    %c7_i32_36 = arith.constant 7 : i32
    %82 = vector.broadcast %c7_i32_36 : i32 to vector<1x64xi32>
    %83 = arith.cmpi eq, %81, %82 : vector<1x64xi32>
    %cst_37 = arith.constant 0.000000e+00 : f32
    %cst_38 = arith.constant 1.000000e+00 : f32
    %84 = vector.broadcast %cst_37 : f32 to vector<1x64xf32>
    %85 = vector.broadcast %cst_38 : f32 to vector<1x64xf32>
    %86 = arith.select %83, %84, %85 : vector<1x64xi1>, vector<1x64xf32>
    %c0_i32_39 = arith.constant 0 : i32
    %87 = vector.broadcast %c0_i32_39 : i32 to vector<1x64xi32>
    %88 = arith.cmpi eq, %81, %87 : vector<1x64xi32>
    %cst_40 = arith.constant 0.000000e+00 : f32
    %cst_41 = arith.constant 1.000000e+00 : f32
    %89 = vector.broadcast %cst_40 : f32 to vector<1x64xf32>
    %90 = vector.broadcast %cst_41 : f32 to vector<1x64xf32>
    %91 = arith.select %88, %89, %90 : vector<1x64xi1>, vector<1x64xf32>
    %92 = vector.broadcast %86 : vector<1x64xf32> to vector<4x64xf32>
    %93 = arith.mulf %78, %92 : vector<4x64xf32>
    %94 = vector.broadcast %91 : vector<1x64xf32> to vector<4x64xf32>
    %95 = arith.mulf %78, %94 : vector<4x64xf32>
    %cst_42 = arith.constant 0.000000e+00 : f32
    %96 = vector.broadcast %cst_42 : f32 to vector<4x9xf32>
    %97 = vector.extract_strided_slice %93 {offsets = [0, 0], sizes = [4, 55], strides = [1, 1]} : vector<4x64xf32> to vector<4x55xf32>
    %98 = tpu.concatenate %96, %97 in 1 : vector<4x9xf32>, vector<4x55xf32> -> vector<4x64xf32>
    %cst_43 = arith.constant 0.000000e+00 : f32
    %99 = vector.broadcast %cst_43 : f32 to vector<4x8xf32>
    %100 = vector.extract_strided_slice %78 {offsets = [0, 0], sizes = [4, 56], strides = [1, 1]} : vector<4x64xf32> to vector<4x56xf32>
    %101 = tpu.concatenate %99, %100 in 1 : vector<4x8xf32>, vector<4x56xf32> -> vector<4x64xf32>
    %cst_44 = arith.constant 0.000000e+00 : f32
    %102 = vector.broadcast %cst_44 : f32 to vector<4x7xf32>
    %103 = vector.extract_strided_slice %95 {offsets = [0, 0], sizes = [4, 57], strides = [1, 1]} : vector<4x64xf32> to vector<4x57xf32>
    %104 = tpu.concatenate %102, %103 in 1 : vector<4x7xf32>, vector<4x57xf32> -> vector<4x64xf32>
    %cst_45 = arith.constant 0.000000e+00 : f32
    %105 = vector.broadcast %cst_45 : f32 to vector<4x1xf32>
    %106 = vector.extract_strided_slice %93 {offsets = [0, 0], sizes = [4, 63], strides = [1, 1]} : vector<4x64xf32> to vector<4x63xf32>
    %107 = tpu.concatenate %105, %106 in 1 : vector<4x1xf32>, vector<4x63xf32> -> vector<4x64xf32>
    %108 = vector.extract_strided_slice %95 {offsets = [0, 1], sizes = [4, 63], strides = [1, 1]} : vector<4x64xf32> to vector<4x63xf32>
    %cst_46 = arith.constant 0.000000e+00 : f32
    %109 = vector.broadcast %cst_46 : f32 to vector<4x1xf32>
    %110 = tpu.concatenate %108, %109 in 1 : vector<4x63xf32>, vector<4x1xf32> -> vector<4x64xf32>
    %111 = vector.extract_strided_slice %93 {offsets = [0, 7], sizes = [4, 57], strides = [1, 1]} : vector<4x64xf32> to vector<4x57xf32>
    %cst_47 = arith.constant 0.000000e+00 : f32
    %112 = vector.broadcast %cst_47 : f32 to vector<4x7xf32>
    %113 = tpu.concatenate %111, %112 in 1 : vector<4x57xf32>, vector<4x7xf32> -> vector<4x64xf32>
    %114 = vector.extract_strided_slice %78 {offsets = [0, 8], sizes = [4, 56], strides = [1, 1]} : vector<4x64xf32> to vector<4x56xf32>
    %cst_48 = arith.constant 0.000000e+00 : f32
    %115 = vector.broadcast %cst_48 : f32 to vector<4x8xf32>
    %116 = tpu.concatenate %114, %115 in 1 : vector<4x56xf32>, vector<4x8xf32> -> vector<4x64xf32>
    %117 = vector.extract_strided_slice %95 {offsets = [0, 9], sizes = [4, 55], strides = [1, 1]} : vector<4x64xf32> to vector<4x55xf32>
    %cst_49 = arith.constant 0.000000e+00 : f32
    %118 = vector.broadcast %cst_49 : f32 to vector<4x9xf32>
    %119 = tpu.concatenate %117, %118 in 1 : vector<4x55xf32>, vector<4x9xf32> -> vector<4x64xf32>
    %120 = tpu.concatenate %98, %101, %104, %107, %78, %110, %113, %116, %119 in 0 : vector<4x64xf32>, vector<4x64xf32>, vector<4x64xf32>, vector<4x64xf32>, vector<4x64xf32>, vector<4x64xf32>, vector<4x64xf32>, vector<4x64xf32>, vector<4x64xf32> -> vector<36x64xf32>
    %121 = vector.extract_strided_slice %77 {offsets = [0, 64], sizes = [4, 64], strides = [1, 1]} : vector<4x256xf32> to vector<4x64xf32>
    %122 = tpu.iota {dimensions = array<i32: 1>} : vector<1x64xi32>
    %c7_i32_50 = arith.constant 7 : i32
    %123 = vector.broadcast %c7_i32_50 : i32 to vector<1x64xi32>
    %124 = arith.andi %122, %123 : vector<1x64xi32>
    %c7_i32_51 = arith.constant 7 : i32
    %125 = vector.broadcast %c7_i32_51 : i32 to vector<1x64xi32>
    %126 = arith.cmpi eq, %124, %125 : vector<1x64xi32>
    %cst_52 = arith.constant 0.000000e+00 : f32
    %cst_53 = arith.constant 1.000000e+00 : f32
    %127 = vector.broadcast %cst_52 : f32 to vector<1x64xf32>
    %128 = vector.broadcast %cst_53 : f32 to vector<1x64xf32>
    %129 = arith.select %126, %127, %128 : vector<1x64xi1>, vector<1x64xf32>
    %c0_i32_54 = arith.constant 0 : i32
    %130 = vector.broadcast %c0_i32_54 : i32 to vector<1x64xi32>
    %131 = arith.cmpi eq, %124, %130 : vector<1x64xi32>
    %cst_55 = arith.constant 0.000000e+00 : f32
    %cst_56 = arith.constant 1.000000e+00 : f32
    %132 = vector.broadcast %cst_55 : f32 to vector<1x64xf32>
    %133 = vector.broadcast %cst_56 : f32 to vector<1x64xf32>
    %134 = arith.select %131, %132, %133 : vector<1x64xi1>, vector<1x64xf32>
    %135 = vector.broadcast %129 : vector<1x64xf32> to vector<4x64xf32>
    %136 = arith.mulf %121, %135 : vector<4x64xf32>
    %137 = vector.broadcast %134 : vector<1x64xf32> to vector<4x64xf32>
    %138 = arith.mulf %121, %137 : vector<4x64xf32>
    %cst_57 = arith.constant 0.000000e+00 : f32
    %139 = vector.broadcast %cst_57 : f32 to vector<4x9xf32>
    %140 = vector.extract_strided_slice %136 {offsets = [0, 0], sizes = [4, 55], strides = [1, 1]} : vector<4x64xf32> to vector<4x55xf32>
    %141 = tpu.concatenate %139, %140 in 1 : vector<4x9xf32>, vector<4x55xf32> -> vector<4x64xf32>
    %cst_58 = arith.constant 0.000000e+00 : f32
    %142 = vector.broadcast %cst_58 : f32 to vector<4x8xf32>
    %143 = vector.extract_strided_slice %121 {offsets = [0, 0], sizes = [4, 56], strides = [1, 1]} : vector<4x64xf32> to vector<4x56xf32>
    %144 = tpu.concatenate %142, %143 in 1 : vector<4x8xf32>, vector<4x56xf32> -> vector<4x64xf32>
    %cst_59 = arith.constant 0.000000e+00 : f32
    %145 = vector.broadcast %cst_59 : f32 to vector<4x7xf32>
    %146 = vector.extract_strided_slice %138 {offsets = [0, 0], sizes = [4, 57], strides = [1, 1]} : vector<4x64xf32> to vector<4x57xf32>
    %147 = tpu.concatenate %145, %146 in 1 : vector<4x7xf32>, vector<4x57xf32> -> vector<4x64xf32>
    %cst_60 = arith.constant 0.000000e+00 : f32
    %148 = vector.broadcast %cst_60 : f32 to vector<4x1xf32>
    %149 = vector.extract_strided_slice %136 {offsets = [0, 0], sizes = [4, 63], strides = [1, 1]} : vector<4x64xf32> to vector<4x63xf32>
    %150 = tpu.concatenate %148, %149 in 1 : vector<4x1xf32>, vector<4x63xf32> -> vector<4x64xf32>
    %151 = vector.extract_strided_slice %138 {offsets = [0, 1], sizes = [4, 63], strides = [1, 1]} : vector<4x64xf32> to vector<4x63xf32>
    %cst_61 = arith.constant 0.000000e+00 : f32
    %152 = vector.broadcast %cst_61 : f32 to vector<4x1xf32>
    %153 = tpu.concatenate %151, %152 in 1 : vector<4x63xf32>, vector<4x1xf32> -> vector<4x64xf32>
    %154 = vector.extract_strided_slice %136 {offsets = [0, 7], sizes = [4, 57], strides = [1, 1]} : vector<4x64xf32> to vector<4x57xf32>
    %cst_62 = arith.constant 0.000000e+00 : f32
    %155 = vector.broadcast %cst_62 : f32 to vector<4x7xf32>
    %156 = tpu.concatenate %154, %155 in 1 : vector<4x57xf32>, vector<4x7xf32> -> vector<4x64xf32>
    %157 = vector.extract_strided_slice %121 {offsets = [0, 8], sizes = [4, 56], strides = [1, 1]} : vector<4x64xf32> to vector<4x56xf32>
    %cst_63 = arith.constant 0.000000e+00 : f32
    %158 = vector.broadcast %cst_63 : f32 to vector<4x8xf32>
    %159 = tpu.concatenate %157, %158 in 1 : vector<4x56xf32>, vector<4x8xf32> -> vector<4x64xf32>
    %160 = vector.extract_strided_slice %138 {offsets = [0, 9], sizes = [4, 55], strides = [1, 1]} : vector<4x64xf32> to vector<4x55xf32>
    %cst_64 = arith.constant 0.000000e+00 : f32
    %161 = vector.broadcast %cst_64 : f32 to vector<4x9xf32>
    %162 = tpu.concatenate %160, %161 in 1 : vector<4x55xf32>, vector<4x9xf32> -> vector<4x64xf32>
    %163 = tpu.concatenate %141, %144, %147, %150, %121, %153, %156, %159, %162 in 0 : vector<4x64xf32>, vector<4x64xf32>, vector<4x64xf32>, vector<4x64xf32>, vector<4x64xf32>, vector<4x64xf32>, vector<4x64xf32>, vector<4x64xf32>, vector<4x64xf32> -> vector<36x64xf32>
    %164 = vector.extract_strided_slice %77 {offsets = [0, 128], sizes = [4, 64], strides = [1, 1]} : vector<4x256xf32> to vector<4x64xf32>
    %165 = tpu.iota {dimensions = array<i32: 1>} : vector<1x64xi32>
    %c7_i32_65 = arith.constant 7 : i32
    %166 = vector.broadcast %c7_i32_65 : i32 to vector<1x64xi32>
    %167 = arith.andi %165, %166 : vector<1x64xi32>
    %c7_i32_66 = arith.constant 7 : i32
    %168 = vector.broadcast %c7_i32_66 : i32 to vector<1x64xi32>
    %169 = arith.cmpi eq, %167, %168 : vector<1x64xi32>
    %cst_67 = arith.constant 0.000000e+00 : f32
    %cst_68 = arith.constant 1.000000e+00 : f32
    %170 = vector.broadcast %cst_67 : f32 to vector<1x64xf32>
    %171 = vector.broadcast %cst_68 : f32 to vector<1x64xf32>
    %172 = arith.select %169, %170, %171 : vector<1x64xi1>, vector<1x64xf32>
    %c0_i32_69 = arith.constant 0 : i32
    %173 = vector.broadcast %c0_i32_69 : i32 to vector<1x64xi32>
    %174 = arith.cmpi eq, %167, %173 : vector<1x64xi32>
    %cst_70 = arith.constant 0.000000e+00 : f32
    %cst_71 = arith.constant 1.000000e+00 : f32
    %175 = vector.broadcast %cst_70 : f32 to vector<1x64xf32>
    %176 = vector.broadcast %cst_71 : f32 to vector<1x64xf32>
    %177 = arith.select %174, %175, %176 : vector<1x64xi1>, vector<1x64xf32>
    %178 = vector.broadcast %172 : vector<1x64xf32> to vector<4x64xf32>
    %179 = arith.mulf %164, %178 : vector<4x64xf32>
    %180 = vector.broadcast %177 : vector<1x64xf32> to vector<4x64xf32>
    %181 = arith.mulf %164, %180 : vector<4x64xf32>
    %cst_72 = arith.constant 0.000000e+00 : f32
    %182 = vector.broadcast %cst_72 : f32 to vector<4x9xf32>
    %183 = vector.extract_strided_slice %179 {offsets = [0, 0], sizes = [4, 55], strides = [1, 1]} : vector<4x64xf32> to vector<4x55xf32>
    %184 = tpu.concatenate %182, %183 in 1 : vector<4x9xf32>, vector<4x55xf32> -> vector<4x64xf32>
    %cst_73 = arith.constant 0.000000e+00 : f32
    %185 = vector.broadcast %cst_73 : f32 to vector<4x8xf32>
    %186 = vector.extract_strided_slice %164 {offsets = [0, 0], sizes = [4, 56], strides = [1, 1]} : vector<4x64xf32> to vector<4x56xf32>
    %187 = tpu.concatenate %185, %186 in 1 : vector<4x8xf32>, vector<4x56xf32> -> vector<4x64xf32>
    %cst_74 = arith.constant 0.000000e+00 : f32
    %188 = vector.broadcast %cst_74 : f32 to vector<4x7xf32>
    %189 = vector.extract_strided_slice %181 {offsets = [0, 0], sizes = [4, 57], strides = [1, 1]} : vector<4x64xf32> to vector<4x57xf32>
    %190 = tpu.concatenate %188, %189 in 1 : vector<4x7xf32>, vector<4x57xf32> -> vector<4x64xf32>
    %cst_75 = arith.constant 0.000000e+00 : f32
    %191 = vector.broadcast %cst_75 : f32 to vector<4x1xf32>
    %192 = vector.extract_strided_slice %179 {offsets = [0, 0], sizes = [4, 63], strides = [1, 1]} : vector<4x64xf32> to vector<4x63xf32>
    %193 = tpu.concatenate %191, %192 in 1 : vector<4x1xf32>, vector<4x63xf32> -> vector<4x64xf32>
    %194 = vector.extract_strided_slice %181 {offsets = [0, 1], sizes = [4, 63], strides = [1, 1]} : vector<4x64xf32> to vector<4x63xf32>
    %cst_76 = arith.constant 0.000000e+00 : f32
    %195 = vector.broadcast %cst_76 : f32 to vector<4x1xf32>
    %196 = tpu.concatenate %194, %195 in 1 : vector<4x63xf32>, vector<4x1xf32> -> vector<4x64xf32>
    %197 = vector.extract_strided_slice %179 {offsets = [0, 7], sizes = [4, 57], strides = [1, 1]} : vector<4x64xf32> to vector<4x57xf32>
    %cst_77 = arith.constant 0.000000e+00 : f32
    %198 = vector.broadcast %cst_77 : f32 to vector<4x7xf32>
    %199 = tpu.concatenate %197, %198 in 1 : vector<4x57xf32>, vector<4x7xf32> -> vector<4x64xf32>
    %200 = vector.extract_strided_slice %164 {offsets = [0, 8], sizes = [4, 56], strides = [1, 1]} : vector<4x64xf32> to vector<4x56xf32>
    %cst_78 = arith.constant 0.000000e+00 : f32
    %201 = vector.broadcast %cst_78 : f32 to vector<4x8xf32>
    %202 = tpu.concatenate %200, %201 in 1 : vector<4x56xf32>, vector<4x8xf32> -> vector<4x64xf32>
    %203 = vector.extract_strided_slice %181 {offsets = [0, 9], sizes = [4, 55], strides = [1, 1]} : vector<4x64xf32> to vector<4x55xf32>
    %cst_79 = arith.constant 0.000000e+00 : f32
    %204 = vector.broadcast %cst_79 : f32 to vector<4x9xf32>
    %205 = tpu.concatenate %203, %204 in 1 : vector<4x55xf32>, vector<4x9xf32> -> vector<4x64xf32>
    %206 = tpu.concatenate %184, %187, %190, %193, %164, %196, %199, %202, %205 in 0 : vector<4x64xf32>, vector<4x64xf32>, vector<4x64xf32>, vector<4x64xf32>, vector<4x64xf32>, vector<4x64xf32>, vector<4x64xf32>, vector<4x64xf32>, vector<4x64xf32> -> vector<36x64xf32>
    %207 = vector.extract_strided_slice %77 {offsets = [0, 192], sizes = [4, 64], strides = [1, 1]} : vector<4x256xf32> to vector<4x64xf32>
    %208 = tpu.iota {dimensions = array<i32: 1>} : vector<1x64xi32>
    %c7_i32_80 = arith.constant 7 : i32
    %209 = vector.broadcast %c7_i32_80 : i32 to vector<1x64xi32>
    %210 = arith.andi %208, %209 : vector<1x64xi32>
    %c7_i32_81 = arith.constant 7 : i32
    %211 = vector.broadcast %c7_i32_81 : i32 to vector<1x64xi32>
    %212 = arith.cmpi eq, %210, %211 : vector<1x64xi32>
    %cst_82 = arith.constant 0.000000e+00 : f32
    %cst_83 = arith.constant 1.000000e+00 : f32
    %213 = vector.broadcast %cst_82 : f32 to vector<1x64xf32>
    %214 = vector.broadcast %cst_83 : f32 to vector<1x64xf32>
    %215 = arith.select %212, %213, %214 : vector<1x64xi1>, vector<1x64xf32>
    %c0_i32_84 = arith.constant 0 : i32
    %216 = vector.broadcast %c0_i32_84 : i32 to vector<1x64xi32>
    %217 = arith.cmpi eq, %210, %216 : vector<1x64xi32>
    %cst_85 = arith.constant 0.000000e+00 : f32
    %cst_86 = arith.constant 1.000000e+00 : f32
    %218 = vector.broadcast %cst_85 : f32 to vector<1x64xf32>
    %219 = vector.broadcast %cst_86 : f32 to vector<1x64xf32>
    %220 = arith.select %217, %218, %219 : vector<1x64xi1>, vector<1x64xf32>
    %221 = vector.broadcast %215 : vector<1x64xf32> to vector<4x64xf32>
    %222 = arith.mulf %207, %221 : vector<4x64xf32>
    %223 = vector.broadcast %220 : vector<1x64xf32> to vector<4x64xf32>
    %224 = arith.mulf %207, %223 : vector<4x64xf32>
    %cst_87 = arith.constant 0.000000e+00 : f32
    %225 = vector.broadcast %cst_87 : f32 to vector<4x9xf32>
    %226 = vector.extract_strided_slice %222 {offsets = [0, 0], sizes = [4, 55], strides = [1, 1]} : vector<4x64xf32> to vector<4x55xf32>
    %227 = tpu.concatenate %225, %226 in 1 : vector<4x9xf32>, vector<4x55xf32> -> vector<4x64xf32>
    %cst_88 = arith.constant 0.000000e+00 : f32
    %228 = vector.broadcast %cst_88 : f32 to vector<4x8xf32>
    %229 = vector.extract_strided_slice %207 {offsets = [0, 0], sizes = [4, 56], strides = [1, 1]} : vector<4x64xf32> to vector<4x56xf32>
    %230 = tpu.concatenate %228, %229 in 1 : vector<4x8xf32>, vector<4x56xf32> -> vector<4x64xf32>
    %cst_89 = arith.constant 0.000000e+00 : f32
    %231 = vector.broadcast %cst_89 : f32 to vector<4x7xf32>
    %232 = vector.extract_strided_slice %224 {offsets = [0, 0], sizes = [4, 57], strides = [1, 1]} : vector<4x64xf32> to vector<4x57xf32>
    %233 = tpu.concatenate %231, %232 in 1 : vector<4x7xf32>, vector<4x57xf32> -> vector<4x64xf32>
    %cst_90 = arith.constant 0.000000e+00 : f32
    %234 = vector.broadcast %cst_90 : f32 to vector<4x1xf32>
    %235 = vector.extract_strided_slice %222 {offsets = [0, 0], sizes = [4, 63], strides = [1, 1]} : vector<4x64xf32> to vector<4x63xf32>
    %236 = tpu.concatenate %234, %235 in 1 : vector<4x1xf32>, vector<4x63xf32> -> vector<4x64xf32>
    %237 = vector.extract_strided_slice %224 {offsets = [0, 1], sizes = [4, 63], strides = [1, 1]} : vector<4x64xf32> to vector<4x63xf32>
    %cst_91 = arith.constant 0.000000e+00 : f32
    %238 = vector.broadcast %cst_91 : f32 to vector<4x1xf32>
    %239 = tpu.concatenate %237, %238 in 1 : vector<4x63xf32>, vector<4x1xf32> -> vector<4x64xf32>
    %240 = vector.extract_strided_slice %222 {offsets = [0, 7], sizes = [4, 57], strides = [1, 1]} : vector<4x64xf32> to vector<4x57xf32>
    %cst_92 = arith.constant 0.000000e+00 : f32
    %241 = vector.broadcast %cst_92 : f32 to vector<4x7xf32>
    %242 = tpu.concatenate %240, %241 in 1 : vector<4x57xf32>, vector<4x7xf32> -> vector<4x64xf32>
    %243 = vector.extract_strided_slice %207 {offsets = [0, 8], sizes = [4, 56], strides = [1, 1]} : vector<4x64xf32> to vector<4x56xf32>
    %cst_93 = arith.constant 0.000000e+00 : f32
    %244 = vector.broadcast %cst_93 : f32 to vector<4x8xf32>
    %245 = tpu.concatenate %243, %244 in 1 : vector<4x56xf32>, vector<4x8xf32> -> vector<4x64xf32>
    %246 = vector.extract_strided_slice %224 {offsets = [0, 9], sizes = [4, 55], strides = [1, 1]} : vector<4x64xf32> to vector<4x55xf32>
    %cst_94 = arith.constant 0.000000e+00 : f32
    %247 = vector.broadcast %cst_94 : f32 to vector<4x9xf32>
    %248 = tpu.concatenate %246, %247 in 1 : vector<4x55xf32>, vector<4x9xf32> -> vector<4x64xf32>
    %249 = tpu.concatenate %227, %230, %233, %236, %207, %239, %242, %245, %248 in 0 : vector<4x64xf32>, vector<4x64xf32>, vector<4x64xf32>, vector<4x64xf32>, vector<4x64xf32>, vector<4x64xf32>, vector<4x64xf32>, vector<4x64xf32>, vector<4x64xf32> -> vector<36x64xf32>
    %c272 = arith.constant 272 : index
    %c0_95 = arith.constant 0 : index
    %250 = vector.load %arg2[%c272, %c0_95] : memref<400x384xf32, #tpu.memory_space<vmem>>, vector<8x145xf32>
    %251 = tpu.concatenate %120, %163, %206, %249 in 0 : vector<36x64xf32>, vector<36x64xf32>, vector<36x64xf32>, vector<36x64xf32> -> vector<144x64xf32>
    %cst_96 = arith.constant 1.000000e+00 : f32
    %252 = vector.broadcast %cst_96 : f32 to vector<1x64xf32>
    %253 = tpu.concatenate %251, %252 in 0 : vector<144x64xf32>, vector<1x64xf32> -> vector<145x64xf32>
    %cst_97 = arith.constant dense<0.000000e+00> : vector<8x64xf32>
    %254 = tpu.matmul %250, %253, %cst_97 {dimension_numbers = #tpu.dot_dimension_numbers<[1], [0], [0], [1], [0, 0, 1, 1], [], []>} : vector<8x145xf32>, vector<145x64xf32>, vector<8x64xf32> -> vector<8x64xf32>
    %cst_98 = arith.constant 0.000000e+00 : f32
    %255 = vector.broadcast %cst_98 : f32 to vector<8x64xf32>
    %256 = arith.cmpf oge, %254, %255 : vector<8x64xf32>
    %cst_99 = arith.constant 2.000000e-01 : f32
    %257 = vector.broadcast %cst_99 : f32 to vector<8x64xf32>
    %258 = arith.mulf %257, %254 : vector<8x64xf32>
    %259 = arith.select %256, %254, %258 : vector<8x64xi1>, vector<8x64xf32>
    %cst_100 = arith.constant 1.41421354 : f32
    %260 = vector.broadcast %cst_100 : f32 to vector<8x64xf32>
    %261 = arith.mulf %259, %260 : vector<8x64xf32>
    %cst_101 = arith.constant -2.560000e+02 : f32
    %cst_102 = arith.constant 2.560000e+02 : f32
    %262 = vector.broadcast %cst_101 : f32 to vector<8x64xf32>
    %263 = arith.maximumf %262, %261 : vector<8x64xf32>
    %264 = vector.broadcast %cst_102 : f32 to vector<8x64xf32>
    %265 = arith.minimumf %264, %263 : vector<8x64xf32>
    %c280 = arith.constant 280 : index
    %c0_103 = arith.constant 0 : index
    %266 = vector.load %arg2[%c280, %c0_103] : memref<400x384xf32, #tpu.memory_space<vmem>>, vector<8x73xf32>
    %267 = tpu.iota {dimensions = array<i32: 1>} : vector<1x64xi32>
    %c7_i32_104 = arith.constant 7 : i32
    %268 = vector.broadcast %c7_i32_104 : i32 to vector<1x64xi32>
    %269 = arith.andi %267, %268 : vector<1x64xi32>
    %c7_i32_105 = arith.constant 7 : i32
    %270 = vector.broadcast %c7_i32_105 : i32 to vector<1x64xi32>
    %271 = arith.cmpi eq, %269, %270 : vector<1x64xi32>
    %cst_106 = arith.constant 0.000000e+00 : f32
    %cst_107 = arith.constant 1.000000e+00 : f32
    %272 = vector.broadcast %cst_106 : f32 to vector<1x64xf32>
    %273 = vector.broadcast %cst_107 : f32 to vector<1x64xf32>
    %274 = arith.select %271, %272, %273 : vector<1x64xi1>, vector<1x64xf32>
    %c0_i32_108 = arith.constant 0 : i32
    %275 = vector.broadcast %c0_i32_108 : i32 to vector<1x64xi32>
    %276 = arith.cmpi eq, %269, %275 : vector<1x64xi32>
    %cst_109 = arith.constant 0.000000e+00 : f32
    %cst_110 = arith.constant 1.000000e+00 : f32
    %277 = vector.broadcast %cst_109 : f32 to vector<1x64xf32>
    %278 = vector.broadcast %cst_110 : f32 to vector<1x64xf32>
    %279 = arith.select %276, %277, %278 : vector<1x64xi1>, vector<1x64xf32>
    %280 = vector.broadcast %274 : vector<1x64xf32> to vector<8x64xf32>
    %281 = arith.mulf %265, %280 : vector<8x64xf32>
    %282 = vector.broadcast %279 : vector<1x64xf32> to vector<8x64xf32>
    %283 = arith.mulf %265, %282 : vector<8x64xf32>
    %cst_111 = arith.constant 0.000000e+00 : f32
    %284 = vector.broadcast %cst_111 : f32 to vector<8x9xf32>
    %285 = vector.extract_strided_slice %281 {offsets = [0, 0], sizes = [8, 55], strides = [1, 1]} : vector<8x64xf32> to vector<8x55xf32>
    %286 = tpu.concatenate %284, %285 in 1 : vector<8x9xf32>, vector<8x55xf32> -> vector<8x64xf32>
    %cst_112 = arith.constant 0.000000e+00 : f32
    %287 = vector.broadcast %cst_112 : f32 to vector<8x8xf32>
    %288 = vector.extract_strided_slice %265 {offsets = [0, 0], sizes = [8, 56], strides = [1, 1]} : vector<8x64xf32> to vector<8x56xf32>
    %289 = tpu.concatenate %287, %288 in 1 : vector<8x8xf32>, vector<8x56xf32> -> vector<8x64xf32>
    %cst_113 = arith.constant 0.000000e+00 : f32
    %290 = vector.broadcast %cst_113 : f32 to vector<8x7xf32>
    %291 = vector.extract_strided_slice %283 {offsets = [0, 0], sizes = [8, 57], strides = [1, 1]} : vector<8x64xf32> to vector<8x57xf32>
    %292 = tpu.concatenate %290, %291 in 1 : vector<8x7xf32>, vector<8x57xf32> -> vector<8x64xf32>
    %cst_114 = arith.constant 0.000000e+00 : f32
    %293 = vector.broadcast %cst_114 : f32 to vector<8x1xf32>
    %294 = vector.extract_strided_slice %281 {offsets = [0, 0], sizes = [8, 63], strides = [1, 1]} : vector<8x64xf32> to vector<8x63xf32>
    %295 = tpu.concatenate %293, %294 in 1 : vector<8x1xf32>, vector<8x63xf32> -> vector<8x64xf32>
    %296 = vector.extract_strided_slice %283 {offsets = [0, 1], sizes = [8, 63], strides = [1, 1]} : vector<8x64xf32> to vector<8x63xf32>
    %cst_115 = arith.constant 0.000000e+00 : f32
    %297 = vector.broadcast %cst_115 : f32 to vector<8x1xf32>
    %298 = tpu.concatenate %296, %297 in 1 : vector<8x63xf32>, vector<8x1xf32> -> vector<8x64xf32>
    %299 = vector.extract_strided_slice %281 {offsets = [0, 7], sizes = [8, 57], strides = [1, 1]} : vector<8x64xf32> to vector<8x57xf32>
    %cst_116 = arith.constant 0.000000e+00 : f32
    %300 = vector.broadcast %cst_116 : f32 to vector<8x7xf32>
    %301 = tpu.concatenate %299, %300 in 1 : vector<8x57xf32>, vector<8x7xf32> -> vector<8x64xf32>
    %302 = vector.extract_strided_slice %265 {offsets = [0, 8], sizes = [8, 56], strides = [1, 1]} : vector<8x64xf32> to vector<8x56xf32>
    %cst_117 = arith.constant 0.000000e+00 : f32
    %303 = vector.broadcast %cst_117 : f32 to vector<8x8xf32>
    %304 = tpu.concatenate %302, %303 in 1 : vector<8x56xf32>, vector<8x8xf32> -> vector<8x64xf32>
    %305 = vector.extract_strided_slice %283 {offsets = [0, 9], sizes = [8, 55], strides = [1, 1]} : vector<8x64xf32> to vector<8x55xf32>
    %cst_118 = arith.constant 0.000000e+00 : f32
    %306 = vector.broadcast %cst_118 : f32 to vector<8x9xf32>
    %307 = tpu.concatenate %305, %306 in 1 : vector<8x55xf32>, vector<8x9xf32> -> vector<8x64xf32>
    %308 = tpu.concatenate %286, %289, %292, %295, %265, %298, %301, %304, %307 in 0 : vector<8x64xf32>, vector<8x64xf32>, vector<8x64xf32>, vector<8x64xf32>, vector<8x64xf32>, vector<8x64xf32>, vector<8x64xf32>, vector<8x64xf32>, vector<8x64xf32> -> vector<72x64xf32>
    %cst_119 = arith.constant 1.000000e+00 : f32
    %309 = vector.broadcast %cst_119 : f32 to vector<1x64xf32>
    %310 = tpu.concatenate %308, %309 in 0 : vector<72x64xf32>, vector<1x64xf32> -> vector<73x64xf32>
    %cst_120 = arith.constant dense<0.000000e+00> : vector<8x64xf32>
    %311 = tpu.matmul %266, %310, %cst_120 {dimension_numbers = #tpu.dot_dimension_numbers<[1], [0], [0], [1], [0, 0, 1, 1], [], []>} : vector<8x73xf32>, vector<73x64xf32>, vector<8x64xf32> -> vector<8x64xf32>
    %cst_121 = arith.constant 0.000000e+00 : f32
    %312 = vector.broadcast %cst_121 : f32 to vector<8x64xf32>
    %313 = arith.cmpf oge, %311, %312 : vector<8x64xf32>
    %cst_122 = arith.constant 2.000000e-01 : f32
    %314 = vector.broadcast %cst_122 : f32 to vector<8x64xf32>
    %315 = arith.mulf %314, %311 : vector<8x64xf32>
    %316 = arith.select %313, %311, %315 : vector<8x64xi1>, vector<8x64xf32>
    %cst_123 = arith.constant 1.41421354 : f32
    %317 = vector.broadcast %cst_123 : f32 to vector<8x64xf32>
    %318 = arith.mulf %316, %317 : vector<8x64xf32>
    %cst_124 = arith.constant -2.560000e+02 : f32
    %cst_125 = arith.constant 2.560000e+02 : f32
    %319 = vector.broadcast %cst_124 : f32 to vector<8x64xf32>
    %320 = arith.maximumf %319, %318 : vector<8x64xf32>
    %321 = vector.broadcast %cst_125 : f32 to vector<8x64xf32>
    %322 = arith.minimumf %321, %320 : vector<8x64xf32>
    %323 = vector.shape_cast %322 : vector<8x64xf32> to vector<1x8x64xf32>
    %c0_126 = arith.constant 0 : index
    %c0_127 = arith.constant 0 : index
    %c0_128 = arith.constant 0 : index
    %324 = vector.load %arg5[%c0_126, %c0_127, %c0_128] : memref<1x8x64xf32, #tpu.memory_space<vmem>>, vector<1x8x64xf32>
    tpu.vector_store %arg5[%c0_126, %c0_127, %c0_128], %323 {strides = array<i32>} : memref<1x8x64xf32, #tpu.memory_space<vmem>>, vector<1x8x64xf32>,
    %c288 = arith.constant 288 : index
    %c0_129 = arith.constant 0 : index
    %325 = vector.load %arg2[%c288, %c0_129] : memref<400x384xf32, #tpu.memory_space<vmem>>, vector<64x64xf32>
    %cst_130 = arith.constant dense<0.000000e+00> : vector<8x64xf32>
    %326 = tpu.matmul %322, %325, %cst_130 {dimension_numbers = #tpu.dot_dimension_numbers<[1], [0], [0], [1], [0, 0, 1, 1], [], []>} : vector<8x64xf32>, vector<64x64xf32>, vector<8x64xf32> -> vector<8x64xf32>
    %327 = vector.extract_strided_slice %326 {offsets = [0, 0], sizes = [8, 16], strides = [1, 1]} : vector<8x64xf32> to vector<8x16xf32>
    %328 = tpu.iota {dimensions = array<i32: 1>} : vector<1x16xi32>
    %c3_i32 = arith.constant 3 : i32
    %329 = vector.broadcast %c3_i32 : i32 to vector<1x16xi32>
    %330 = arith.andi %328, %329 : vector<1x16xi32>
    %c3_i32_131 = arith.constant 3 : i32
    %331 = vector.broadcast %c3_i32_131 : i32 to vector<1x16xi32>
    %332 = arith.cmpi eq, %330, %331 : vector<1x16xi32>
    %cst_132 = arith.constant 0.000000e+00 : f32
    %cst_133 = arith.constant 1.000000e+00 : f32
    %333 = vector.broadcast %cst_132 : f32 to vector<1x16xf32>
    %334 = vector.broadcast %cst_133 : f32 to vector<1x16xf32>
    %335 = arith.select %332, %333, %334 : vector<1x16xi1>, vector<1x16xf32>
    %c0_i32_134 = arith.constant 0 : i32
    %336 = vector.broadcast %c0_i32_134 : i32 to vector<1x16xi32>
    %337 = arith.cmpi eq, %330, %336 : vector<1x16xi32>
    %cst_135 = arith.constant 0.000000e+00 : f32
    %cst_136 = arith.constant 1.000000e+00 : f32
    %338 = vector.broadcast %cst_135 : f32 to vector<1x16xf32>
    %339 = vector.broadcast %cst_136 : f32 to vector<1x16xf32>
    %340 = arith.select %337, %338, %339 : vector<1x16xi1>, vector<1x16xf32>
    %341 = vector.broadcast %335 : vector<1x16xf32> to vector<8x16xf32>
    %342 = arith.mulf %327, %341 : vector<8x16xf32>
    %343 = vector.broadcast %340 : vector<1x16xf32> to vector<8x16xf32>
    %344 = arith.mulf %327, %343 : vector<8x16xf32>
    %cst_137 = arith.constant 0.000000e+00 : f32
    %345 = vector.broadcast %cst_137 : f32 to vector<8x5xf32>
    %346 = vector.extract_strided_slice %342 {offsets = [0, 0], sizes = [8, 11], strides = [1, 1]} : vector<8x16xf32> to vector<8x11xf32>
    %347 = tpu.concatenate %345, %346 in 1 : vector<8x5xf32>, vector<8x11xf32> -> vector<8x16xf32>
    %cst_138 = arith.constant 0.000000e+00 : f32
    %348 = vector.broadcast %cst_138 : f32 to vector<8x4xf32>
    %349 = vector.extract_strided_slice %327 {offsets = [0, 0], sizes = [8, 12], strides = [1, 1]} : vector<8x16xf32> to vector<8x12xf32>
    %350 = tpu.concatenate %348, %349 in 1 : vector<8x4xf32>, vector<8x12xf32> -> vector<8x16xf32>
    %cst_139 = arith.constant 0.000000e+00 : f32
    %351 = vector.broadcast %cst_139 : f32 to vector<8x3xf32>
    %352 = vector.extract_strided_slice %344 {offsets = [0, 0], sizes = [8, 13], strides = [1, 1]} : vector<8x16xf32> to vector<8x13xf32>
    %353 = tpu.concatenate %351, %352 in 1 : vector<8x3xf32>, vector<8x13xf32> -> vector<8x16xf32>
    %cst_140 = arith.constant 0.000000e+00 : f32
    %354 = vector.broadcast %cst_140 : f32 to vector<8x1xf32>
    %355 = vector.extract_strided_slice %342 {offsets = [0, 0], sizes = [8, 15], strides = [1, 1]} : vector<8x16xf32> to vector<8x15xf32>
    %356 = tpu.concatenate %354, %355 in 1 : vector<8x1xf32>, vector<8x15xf32> -> vector<8x16xf32>
    %357 = vector.extract_strided_slice %344 {offsets = [0, 1], sizes = [8, 15], strides = [1, 1]} : vector<8x16xf32> to vector<8x15xf32>
    %cst_141 = arith.constant 0.000000e+00 : f32
    %358 = vector.broadcast %cst_141 : f32 to vector<8x1xf32>
    %359 = tpu.concatenate %357, %358 in 1 : vector<8x15xf32>, vector<8x1xf32> -> vector<8x16xf32>
    %360 = vector.extract_strided_slice %342 {offsets = [0, 3], sizes = [8, 13], strides = [1, 1]} : vector<8x16xf32> to vector<8x13xf32>
    %cst_142 = arith.constant 0.000000e+00 : f32
    %361 = vector.broadcast %cst_142 : f32 to vector<8x3xf32>
    %362 = tpu.concatenate %360, %361 in 1 : vector<8x13xf32>, vector<8x3xf32> -> vector<8x16xf32>
    %363 = vector.extract_strided_slice %327 {offsets = [0, 4], sizes = [8, 12], strides = [1, 1]} : vector<8x16xf32> to vector<8x12xf32>
    %cst_143 = arith.constant 0.000000e+00 : f32
    %364 = vector.broadcast %cst_143 : f32 to vector<8x4xf32>
    %365 = tpu.concatenate %363, %364 in 1 : vector<8x12xf32>, vector<8x4xf32> -> vector<8x16xf32>
    %366 = vector.extract_strided_slice %344 {offsets = [0, 5], sizes = [8, 11], strides = [1, 1]} : vector<8x16xf32> to vector<8x11xf32>
    %cst_144 = arith.constant 0.000000e+00 : f32
    %367 = vector.broadcast %cst_144 : f32 to vector<8x5xf32>
    %368 = tpu.concatenate %366, %367 in 1 : vector<8x11xf32>, vector<8x5xf32> -> vector<8x16xf32>
    %369 = tpu.concatenate %347, %350, %353, %356, %327, %359, %362, %365, %368 in 0 : vector<8x16xf32>, vector<8x16xf32>, vector<8x16xf32>, vector<8x16xf32>, vector<8x16xf32>, vector<8x16xf32>, vector<8x16xf32>, vector<8x16xf32>, vector<8x16xf32> -> vector<72x16xf32>
    %370 = vector.extract_strided_slice %326 {offsets = [0, 16], sizes = [8, 16], strides = [1, 1]} : vector<8x64xf32> to vector<8x16xf32>
    %371 = tpu.iota {dimensions = array<i32: 1>} : vector<1x16xi32>
    %c3_i32_145 = arith.constant 3 : i32
    %372 = vector.broadcast %c3_i32_145 : i32 to vector<1x16xi32>
    %373 = arith.andi %371, %372 : vector<1x16xi32>
    %c3_i32_146 = arith.constant 3 : i32
    %374 = vector.broadcast %c3_i32_146 : i32 to vector<1x16xi32>
    %375 = arith.cmpi eq, %373, %374 : vector<1x16xi32>
    %cst_147 = arith.constant 0.000000e+00 : f32
    %cst_148 = arith.constant 1.000000e+00 : f32
    %376 = vector.broadcast %cst_147 : f32 to vector<1x16xf32>
    %377 = vector.broadcast %cst_148 : f32 to vector<1x16xf32>
    %378 = arith.select %375, %376, %377 : vector<1x16xi1>, vector<1x16xf32>
    %c0_i32_149 = arith.constant 0 : i32
    %379 = vector.broadcast %c0_i32_149 : i32 to vector<1x16xi32>
    %380 = arith.cmpi eq, %373, %379 : vector<1x16xi32>
    %cst_150 = arith.constant 0.000000e+00 : f32
    %cst_151 = arith.constant 1.000000e+00 : f32
    %381 = vector.broadcast %cst_150 : f32 to vector<1x16xf32>
    %382 = vector.broadcast %cst_151 : f32 to vector<1x16xf32>
    %383 = arith.select %380, %381, %382 : vector<1x16xi1>, vector<1x16xf32>
    %384 = vector.broadcast %378 : vector<1x16xf32> to vector<8x16xf32>
    %385 = arith.mulf %370, %384 : vector<8x16xf32>
    %386 = vector.broadcast %383 : vector<1x16xf32> to vector<8x16xf32>
    %387 = arith.mulf %370, %386 : vector<8x16xf32>
    %cst_152 = arith.constant 0.000000e+00 : f32
    %388 = vector.broadcast %cst_152 : f32 to vector<8x5xf32>
    %389 = vector.extract_strided_slice %385 {offsets = [0, 0], sizes = [8, 11], strides = [1, 1]} : vector<8x16xf32> to vector<8x11xf32>
    %390 = tpu.concatenate %388, %389 in 1 : vector<8x5xf32>, vector<8x11xf32> -> vector<8x16xf32>
    %cst_153 = arith.constant 0.000000e+00 : f32
    %391 = vector.broadcast %cst_153 : f32 to vector<8x4xf32>
    %392 = vector.extract_strided_slice %370 {offsets = [0, 0], sizes = [8, 12], strides = [1, 1]} : vector<8x16xf32> to vector<8x12xf32>
    %393 = tpu.concatenate %391, %392 in 1 : vector<8x4xf32>, vector<8x12xf32> -> vector<8x16xf32>
    %cst_154 = arith.constant 0.000000e+00 : f32
    %394 = vector.broadcast %cst_154 : f32 to vector<8x3xf32>
    %395 = vector.extract_strided_slice %387 {offsets = [0, 0], sizes = [8, 13], strides = [1, 1]} : vector<8x16xf32> to vector<8x13xf32>
    %396 = tpu.concatenate %394, %395 in 1 : vector<8x3xf32>, vector<8x13xf32> -> vector<8x16xf32>
    %cst_155 = arith.constant 0.000000e+00 : f32
    %397 = vector.broadcast %cst_155 : f32 to vector<8x1xf32>
    %398 = vector.extract_strided_slice %385 {offsets = [0, 0], sizes = [8, 15], strides = [1, 1]} : vector<8x16xf32> to vector<8x15xf32>
    %399 = tpu.concatenate %397, %398 in 1 : vector<8x1xf32>, vector<8x15xf32> -> vector<8x16xf32>
    %400 = vector.extract_strided_slice %387 {offsets = [0, 1], sizes = [8, 15], strides = [1, 1]} : vector<8x16xf32> to vector<8x15xf32>
    %cst_156 = arith.constant 0.000000e+00 : f32
    %401 = vector.broadcast %cst_156 : f32 to vector<8x1xf32>
    %402 = tpu.concatenate %400, %401 in 1 : vector<8x15xf32>, vector<8x1xf32> -> vector<8x16xf32>
    %403 = vector.extract_strided_slice %385 {offsets = [0, 3], sizes = [8, 13], strides = [1, 1]} : vector<8x16xf32> to vector<8x13xf32>
    %cst_157 = arith.constant 0.000000e+00 : f32
    %404 = vector.broadcast %cst_157 : f32 to vector<8x3xf32>
    %405 = tpu.concatenate %403, %404 in 1 : vector<8x13xf32>, vector<8x3xf32> -> vector<8x16xf32>
    %406 = vector.extract_strided_slice %370 {offsets = [0, 4], sizes = [8, 12], strides = [1, 1]} : vector<8x16xf32> to vector<8x12xf32>
    %cst_158 = arith.constant 0.000000e+00 : f32
    %407 = vector.broadcast %cst_158 : f32 to vector<8x4xf32>
    %408 = tpu.concatenate %406, %407 in 1 : vector<8x12xf32>, vector<8x4xf32> -> vector<8x16xf32>
    %409 = vector.extract_strided_slice %387 {offsets = [0, 5], sizes = [8, 11], strides = [1, 1]} : vector<8x16xf32> to vector<8x11xf32>
    %cst_159 = arith.constant 0.000000e+00 : f32
    %410 = vector.broadcast %cst_159 : f32 to vector<8x5xf32>
    %411 = tpu.concatenate %409, %410 in 1 : vector<8x11xf32>, vector<8x5xf32> -> vector<8x16xf32>
    %412 = tpu.concatenate %390, %393, %396, %399, %370, %402, %405, %408, %411 in 0 : vector<8x16xf32>, vector<8x16xf32>, vector<8x16xf32>, vector<8x16xf32>, vector<8x16xf32>, vector<8x16xf32>, vector<8x16xf32>, vector<8x16xf32>, vector<8x16xf32> -> vector<72x16xf32>
    %413 = vector.extract_strided_slice %326 {offsets = [0, 32], sizes = [8, 16], strides = [1, 1]} : vector<8x64xf32> to vector<8x16xf32>
    %414 = tpu.iota {dimensions = array<i32: 1>} : vector<1x16xi32>
    %c3_i32_160 = arith.constant 3 : i32
    %415 = vector.broadcast %c3_i32_160 : i32 to vector<1x16xi32>
    %416 = arith.andi %414, %415 : vector<1x16xi32>
    %c3_i32_161 = arith.constant 3 : i32
    %417 = vector.broadcast %c3_i32_161 : i32 to vector<1x16xi32>
    %418 = arith.cmpi eq, %416, %417 : vector<1x16xi32>
    %cst_162 = arith.constant 0.000000e+00 : f32
    %cst_163 = arith.constant 1.000000e+00 : f32
    %419 = vector.broadcast %cst_162 : f32 to vector<1x16xf32>
    %420 = vector.broadcast %cst_163 : f32 to vector<1x16xf32>
    %421 = arith.select %418, %419, %420 : vector<1x16xi1>, vector<1x16xf32>
    %c0_i32_164 = arith.constant 0 : i32
    %422 = vector.broadcast %c0_i32_164 : i32 to vector<1x16xi32>
    %423 = arith.cmpi eq, %416, %422 : vector<1x16xi32>
    %cst_165 = arith.constant 0.000000e+00 : f32
    %cst_166 = arith.constant 1.000000e+00 : f32
    %424 = vector.broadcast %cst_165 : f32 to vector<1x16xf32>
    %425 = vector.broadcast %cst_166 : f32 to vector<1x16xf32>
    %426 = arith.select %423, %424, %425 : vector<1x16xi1>, vector<1x16xf32>
    %427 = vector.broadcast %421 : vector<1x16xf32> to vector<8x16xf32>
    %428 = arith.mulf %413, %427 : vector<8x16xf32>
    %429 = vector.broadcast %426 : vector<1x16xf32> to vector<8x16xf32>
    %430 = arith.mulf %413, %429 : vector<8x16xf32>
    %cst_167 = arith.constant 0.000000e+00 : f32
    %431 = vector.broadcast %cst_167 : f32 to vector<8x5xf32>
    %432 = vector.extract_strided_slice %428 {offsets = [0, 0], sizes = [8, 11], strides = [1, 1]} : vector<8x16xf32> to vector<8x11xf32>
    %433 = tpu.concatenate %431, %432 in 1 : vector<8x5xf32>, vector<8x11xf32> -> vector<8x16xf32>
    %cst_168 = arith.constant 0.000000e+00 : f32
    %434 = vector.broadcast %cst_168 : f32 to vector<8x4xf32>
    %435 = vector.extract_strided_slice %413 {offsets = [0, 0], sizes = [8, 12], strides = [1, 1]} : vector<8x16xf32> to vector<8x12xf32>
    %436 = tpu.concatenate %434, %435 in 1 : vector<8x4xf32>, vector<8x12xf32> -> vector<8x16xf32>
    %cst_169 = arith.constant 0.000000e+00 : f32
    %437 = vector.broadcast %cst_169 : f32 to vector<8x3xf32>
    %438 = vector.extract_strided_slice %430 {offsets = [0, 0], sizes = [8, 13], strides = [1, 1]} : vector<8x16xf32> to vector<8x13xf32>
    %439 = tpu.concatenate %437, %438 in 1 : vector<8x3xf32>, vector<8x13xf32> -> vector<8x16xf32>
    %cst_170 = arith.constant 0.000000e+00 : f32
    %440 = vector.broadcast %cst_170 : f32 to vector<8x1xf32>
    %441 = vector.extract_strided_slice %428 {offsets = [0, 0], sizes = [8, 15], strides = [1, 1]} : vector<8x16xf32> to vector<8x15xf32>
    %442 = tpu.concatenate %440, %441 in 1 : vector<8x1xf32>, vector<8x15xf32> -> vector<8x16xf32>
    %443 = vector.extract_strided_slice %430 {offsets = [0, 1], sizes = [8, 15], strides = [1, 1]} : vector<8x16xf32> to vector<8x15xf32>
    %cst_171 = arith.constant 0.000000e+00 : f32
    %444 = vector.broadcast %cst_171 : f32 to vector<8x1xf32>
    %445 = tpu.concatenate %443, %444 in 1 : vector<8x15xf32>, vector<8x1xf32> -> vector<8x16xf32>
    %446 = vector.extract_strided_slice %428 {offsets = [0, 3], sizes = [8, 13], strides = [1, 1]} : vector<8x16xf32> to vector<8x13xf32>
    %cst_172 = arith.constant 0.000000e+00 : f32
    %447 = vector.broadcast %cst_172 : f32 to vector<8x3xf32>
    %448 = tpu.concatenate %446, %447 in 1 : vector<8x13xf32>, vector<8x3xf32> -> vector<8x16xf32>
    %449 = vector.extract_strided_slice %413 {offsets = [0, 4], sizes = [8, 12], strides = [1, 1]} : vector<8x16xf32> to vector<8x12xf32>
    %cst_173 = arith.constant 0.000000e+00 : f32
    %450 = vector.broadcast %cst_173 : f32 to vector<8x4xf32>
    %451 = tpu.concatenate %449, %450 in 1 : vector<8x12xf32>, vector<8x4xf32> -> vector<8x16xf32>
    %452 = vector.extract_strided_slice %430 {offsets = [0, 5], sizes = [8, 11], strides = [1, 1]} : vector<8x16xf32> to vector<8x11xf32>
    %cst_174 = arith.constant 0.000000e+00 : f32
    %453 = vector.broadcast %cst_174 : f32 to vector<8x5xf32>
    %454 = tpu.concatenate %452, %453 in 1 : vector<8x11xf32>, vector<8x5xf32> -> vector<8x16xf32>
    %455 = tpu.concatenate %433, %436, %439, %442, %413, %445, %448, %451, %454 in 0 : vector<8x16xf32>, vector<8x16xf32>, vector<8x16xf32>, vector<8x16xf32>, vector<8x16xf32>, vector<8x16xf32>, vector<8x16xf32>, vector<8x16xf32>, vector<8x16xf32> -> vector<72x16xf32>
    %456 = vector.extract_strided_slice %326 {offsets = [0, 48], sizes = [8, 16], strides = [1, 1]} : vector<8x64xf32> to vector<8x16xf32>
    %457 = tpu.iota {dimensions = array<i32: 1>} : vector<1x16xi32>
    %c3_i32_175 = arith.constant 3 : i32
    %458 = vector.broadcast %c3_i32_175 : i32 to vector<1x16xi32>
    %459 = arith.andi %457, %458 : vector<1x16xi32>
    %c3_i32_176 = arith.constant 3 : i32
    %460 = vector.broadcast %c3_i32_176 : i32 to vector<1x16xi32>
    %461 = arith.cmpi eq, %459, %460 : vector<1x16xi32>
    %cst_177 = arith.constant 0.000000e+00 : f32
    %cst_178 = arith.constant 1.000000e+00 : f32
    %462 = vector.broadcast %cst_177 : f32 to vector<1x16xf32>
    %463 = vector.broadcast %cst_178 : f32 to vector<1x16xf32>
    %464 = arith.select %461, %462, %463 : vector<1x16xi1>, vector<1x16xf32>
    %c0_i32_179 = arith.constant 0 : i32
    %465 = vector.broadcast %c0_i32_179 : i32 to vector<1x16xi32>
    %466 = arith.cmpi eq, %459, %465 : vector<1x16xi32>
    %cst_180 = arith.constant 0.000000e+00 : f32
    %cst_181 = arith.constant 1.000000e+00 : f32
    %467 = vector.broadcast %cst_180 : f32 to vector<1x16xf32>
    %468 = vector.broadcast %cst_181 : f32 to vector<1x16xf32>
    %469 = arith.select %466, %467, %468 : vector<1x16xi1>, vector<1x16xf32>
    %470 = vector.broadcast %464 : vector<1x16xf32> to vector<8x16xf32>
    %471 = arith.mulf %456, %470 : vector<8x16xf32>
    %472 = vector.broadcast %469 : vector<1x16xf32> to vector<8x16xf32>
    %473 = arith.mulf %456, %472 : vector<8x16xf32>
    %cst_182 = arith.constant 0.000000e+00 : f32
    %474 = vector.broadcast %cst_182 : f32 to vector<8x5xf32>
    %475 = vector.extract_strided_slice %471 {offsets = [0, 0], sizes = [8, 11], strides = [1, 1]} : vector<8x16xf32> to vector<8x11xf32>
    %476 = tpu.concatenate %474, %475 in 1 : vector<8x5xf32>, vector<8x11xf32> -> vector<8x16xf32>
    %cst_183 = arith.constant 0.000000e+00 : f32
    %477 = vector.broadcast %cst_183 : f32 to vector<8x4xf32>
    %478 = vector.extract_strided_slice %456 {offsets = [0, 0], sizes = [8, 12], strides = [1, 1]} : vector<8x16xf32> to vector<8x12xf32>
    %479 = tpu.concatenate %477, %478 in 1 : vector<8x4xf32>, vector<8x12xf32> -> vector<8x16xf32>
    %cst_184 = arith.constant 0.000000e+00 : f32
    %480 = vector.broadcast %cst_184 : f32 to vector<8x3xf32>
    %481 = vector.extract_strided_slice %473 {offsets = [0, 0], sizes = [8, 13], strides = [1, 1]} : vector<8x16xf32> to vector<8x13xf32>
    %482 = tpu.concatenate %480, %481 in 1 : vector<8x3xf32>, vector<8x13xf32> -> vector<8x16xf32>
    %cst_185 = arith.constant 0.000000e+00 : f32
    %483 = vector.broadcast %cst_185 : f32 to vector<8x1xf32>
    %484 = vector.extract_strided_slice %471 {offsets = [0, 0], sizes = [8, 15], strides = [1, 1]} : vector<8x16xf32> to vector<8x15xf32>
    %485 = tpu.concatenate %483, %484 in 1 : vector<8x1xf32>, vector<8x15xf32> -> vector<8x16xf32>
    %486 = vector.extract_strided_slice %473 {offsets = [0, 1], sizes = [8, 15], strides = [1, 1]} : vector<8x16xf32> to vector<8x15xf32>
    %cst_186 = arith.constant 0.000000e+00 : f32
    %487 = vector.broadcast %cst_186 : f32 to vector<8x1xf32>
    %488 = tpu.concatenate %486, %487 in 1 : vector<8x15xf32>, vector<8x1xf32> -> vector<8x16xf32>
    %489 = vector.extract_strided_slice %471 {offsets = [0, 3], sizes = [8, 13], strides = [1, 1]} : vector<8x16xf32> to vector<8x13xf32>
    %cst_187 = arith.constant 0.000000e+00 : f32
    %490 = vector.broadcast %cst_187 : f32 to vector<8x3xf32>
    %491 = tpu.concatenate %489, %490 in 1 : vector<8x13xf32>, vector<8x3xf32> -> vector<8x16xf32>
    %492 = vector.extract_strided_slice %456 {offsets = [0, 4], sizes = [8, 12], strides = [1, 1]} : vector<8x16xf32> to vector<8x12xf32>
    %cst_188 = arith.constant 0.000000e+00 : f32
    %493 = vector.broadcast %cst_188 : f32 to vector<8x4xf32>
    %494 = tpu.concatenate %492, %493 in 1 : vector<8x12xf32>, vector<8x4xf32> -> vector<8x16xf32>
    %495 = vector.extract_strided_slice %473 {offsets = [0, 5], sizes = [8, 11], strides = [1, 1]} : vector<8x16xf32> to vector<8x11xf32>
    %cst_189 = arith.constant 0.000000e+00 : f32
    %496 = vector.broadcast %cst_189 : f32 to vector<8x5xf32>
    %497 = tpu.concatenate %495, %496 in 1 : vector<8x11xf32>, vector<8x5xf32> -> vector<8x16xf32>
    %498 = tpu.concatenate %476, %479, %482, %485, %456, %488, %491, %494, %497 in 0 : vector<8x16xf32>, vector<8x16xf32>, vector<8x16xf32>, vector<8x16xf32>, vector<8x16xf32>, vector<8x16xf32>, vector<8x16xf32>, vector<8x16xf32>, vector<8x16xf32> -> vector<72x16xf32>
    %c352 = arith.constant 352 : index
    %c0_190 = arith.constant 0 : index
    %499 = vector.load %arg2[%c352, %c0_190] : memref<400x384xf32, #tpu.memory_space<vmem>>, vector<16x289xf32>
    %500 = tpu.concatenate %369, %412, %455, %498 in 0 : vector<72x16xf32>, vector<72x16xf32>, vector<72x16xf32>, vector<72x16xf32> -> vector<288x16xf32>
    %cst_191 = arith.constant 1.000000e+00 : f32
    %501 = vector.broadcast %cst_191 : f32 to vector<1x16xf32>
    %502 = tpu.concatenate %500, %501 in 0 : vector<288x16xf32>, vector<1x16xf32> -> vector<289x16xf32>
    %cst_192 = arith.constant dense<0.000000e+00> : vector<16x16xf32>
    %503 = tpu.matmul %499, %502, %cst_192 {dimension_numbers = #tpu.dot_dimension_numbers<[1], [0], [0], [1], [0, 0, 1, 1], [], []>} : vector<16x289xf32>, vector<289x16xf32>, vector<16x16xf32> -> vector<16x16xf32>
    %cst_193 = arith.constant 0.000000e+00 : f32
    %504 = vector.broadcast %cst_193 : f32 to vector<16x16xf32>
    %505 = arith.cmpf oge, %503, %504 : vector<16x16xf32>
    %cst_194 = arith.constant 2.000000e-01 : f32
    %506 = vector.broadcast %cst_194 : f32 to vector<16x16xf32>
    %507 = arith.mulf %506, %503 : vector<16x16xf32>
    %508 = arith.select %505, %503, %507 : vector<16x16xi1>, vector<16x16xf32>
    %cst_195 = arith.constant 1.41421354 : f32
    %509 = vector.broadcast %cst_195 : f32 to vector<16x16xf32>
    %510 = arith.mulf %508, %509 : vector<16x16xf32>
    %cst_196 = arith.constant -2.560000e+02 : f32
    %cst_197 = arith.constant 2.560000e+02 : f32
    %511 = vector.broadcast %cst_196 : f32 to vector<16x16xf32>
    %512 = arith.maximumf %511, %510 : vector<16x16xf32>
    %513 = vector.broadcast %cst_197 : f32 to vector<16x16xf32>
    %514 = arith.minimumf %513, %512 : vector<16x16xf32>
    %c368 = arith.constant 368 : index
    %c0_198 = arith.constant 0 : index
    %515 = vector.load %arg2[%c368, %c0_198] : memref<400x384xf32, #tpu.memory_space<vmem>>, vector<16x145xf32>
    %516 = tpu.iota {dimensions = array<i32: 1>} : vector<1x16xi32>
    %c3_i32_199 = arith.constant 3 : i32
    %517 = vector.broadcast %c3_i32_199 : i32 to vector<1x16xi32>
    %518 = arith.andi %516, %517 : vector<1x16xi32>
    %c3_i32_200 = arith.constant 3 : i32
    %519 = vector.broadcast %c3_i32_200 : i32 to vector<1x16xi32>
    %520 = arith.cmpi eq, %518, %519 : vector<1x16xi32>
    %cst_201 = arith.constant 0.000000e+00 : f32
    %cst_202 = arith.constant 1.000000e+00 : f32
    %521 = vector.broadcast %cst_201 : f32 to vector<1x16xf32>
    %522 = vector.broadcast %cst_202 : f32 to vector<1x16xf32>
    %523 = arith.select %520, %521, %522 : vector<1x16xi1>, vector<1x16xf32>
    %c0_i32_203 = arith.constant 0 : i32
    %524 = vector.broadcast %c0_i32_203 : i32 to vector<1x16xi32>
    %525 = arith.cmpi eq, %518, %524 : vector<1x16xi32>
    %cst_204 = arith.constant 0.000000e+00 : f32
    %cst_205 = arith.constant 1.000000e+00 : f32
    %526 = vector.broadcast %cst_204 : f32 to vector<1x16xf32>
    %527 = vector.broadcast %cst_205 : f32 to vector<1x16xf32>
    %528 = arith.select %525, %526, %527 : vector<1x16xi1>, vector<1x16xf32>
    %529 = vector.broadcast %523 : vector<1x16xf32> to vector<16x16xf32>
    %530 = arith.mulf %514, %529 : vector<16x16xf32>
    %531 = vector.broadcast %528 : vector<1x16xf32> to vector<16x16xf32>
    %532 = arith.mulf %514, %531 : vector<16x16xf32>
    %cst_206 = arith.constant 0.000000e+00 : f32
    %533 = vector.broadcast %cst_206 : f32 to vector<16x5xf32>
    %534 = vector.extract_strided_slice %530 {offsets = [0, 0], sizes = [16, 11], strides = [1, 1]} : vector<16x16xf32> to vector<16x11xf32>
    %535 = tpu.concatenate %533, %534 in 1 : vector<16x5xf32>, vector<16x11xf32> -> vector<16x16xf32>
    %cst_207 = arith.constant 0.000000e+00 : f32
    %536 = vector.broadcast %cst_207 : f32 to vector<16x4xf32>
    %537 = vector.extract_strided_slice %514 {offsets = [0, 0], sizes = [16, 12], strides = [1, 1]} : vector<16x16xf32> to vector<16x12xf32>
    %538 = tpu.concatenate %536, %537 in 1 : vector<16x4xf32>, vector<16x12xf32> -> vector<16x16xf32>
    %cst_208 = arith.constant 0.000000e+00 : f32
    %539 = vector.broadcast %cst_208 : f32 to vector<16x3xf32>
    %540 = vector.extract_strided_slice %532 {offsets = [0, 0], sizes = [16, 13], strides = [1, 1]} : vector<16x16xf32> to vector<16x13xf32>
    %541 = tpu.concatenate %539, %540 in 1 : vector<16x3xf32>, vector<16x13xf32> -> vector<16x16xf32>
    %cst_209 = arith.constant 0.000000e+00 : f32
    %542 = vector.broadcast %cst_209 : f32 to vector<16x1xf32>
    %543 = vector.extract_strided_slice %530 {offsets = [0, 0], sizes = [16, 15], strides = [1, 1]} : vector<16x16xf32> to vector<16x15xf32>
    %544 = tpu.concatenate %542, %543 in 1 : vector<16x1xf32>, vector<16x15xf32> -> vector<16x16xf32>
    %545 = vector.extract_strided_slice %532 {offsets = [0, 1], sizes = [16, 15], strides = [1, 1]} : vector<16x16xf32> to vector<16x15xf32>
    %cst_210 = arith.constant 0.000000e+00 : f32
    %546 = vector.broadcast %cst_210 : f32 to vector<16x1xf32>
    %547 = tpu.concatenate %545, %546 in 1 : vector<16x15xf32>, vector<16x1xf32> -> vector<16x16xf32>
    %548 = vector.extract_strided_slice %530 {offsets = [0, 3], sizes = [16, 13], strides = [1, 1]} : vector<16x16xf32> to vector<16x13xf32>
    %cst_211 = arith.constant 0.000000e+00 : f32
    %549 = vector.broadcast %cst_211 : f32 to vector<16x3xf32>
    %550 = tpu.concatenate %548, %549 in 1 : vector<16x13xf32>, vector<16x3xf32> -> vector<16x16xf32>
    %551 = vector.extract_strided_slice %514 {offsets = [0, 4], sizes = [16, 12], strides = [1, 1]} : vector<16x16xf32> to vector<16x12xf32>
    %cst_212 = arith.constant 0.000000e+00 : f32
    %552 = vector.broadcast %cst_212 : f32 to vector<16x4xf32>
    %553 = tpu.concatenate %551, %552 in 1 : vector<16x12xf32>, vector<16x4xf32> -> vector<16x16xf32>
    %554 = vector.extract_strided_slice %532 {offsets = [0, 5], sizes = [16, 11], strides = [1, 1]} : vector<16x16xf32> to vector<16x11xf32>
    %cst_213 = arith.constant 0.000000e+00 : f32
    %555 = vector.broadcast %cst_213 : f32 to vector<16x5xf32>
    %556 = tpu.concatenate %554, %555 in 1 : vector<16x11xf32>, vector<16x5xf32> -> vector<16x16xf32>
    %557 = tpu.concatenate %535, %538, %541, %544, %514, %547, %550, %553, %556 in 0 : vector<16x16xf32>, vector<16x16xf32>, vector<16x16xf32>, vector<16x16xf32>, vector<16x16xf32>, vector<16x16xf32>, vector<16x16xf32>, vector<16x16xf32>, vector<16x16xf32> -> vector<144x16xf32>
    %cst_214 = arith.constant 1.000000e+00 : f32
    %558 = vector.broadcast %cst_214 : f32 to vector<1x16xf32>
    %559 = tpu.concatenate %557, %558 in 0 : vector<144x16xf32>, vector<1x16xf32> -> vector<145x16xf32>
    %cst_215 = arith.constant dense<0.000000e+00> : vector<16x16xf32>
    %560 = tpu.matmul %515, %559, %cst_215 {dimension_numbers = #tpu.dot_dimension_numbers<[1], [0], [0], [1], [0, 0, 1, 1], [], []>} : vector<16x145xf32>, vector<145x16xf32>, vector<16x16xf32> -> vector<16x16xf32>
    %cst_216 = arith.constant 0.000000e+00 : f32
    %561 = vector.broadcast %cst_216 : f32 to vector<16x16xf32>
    %562 = arith.cmpf oge, %560, %561 : vector<16x16xf32>
    %cst_217 = arith.constant 2.000000e-01 : f32
    %563 = vector.broadcast %cst_217 : f32 to vector<16x16xf32>
    %564 = arith.mulf %563, %560 : vector<16x16xf32>
    %565 = arith.select %562, %560, %564 : vector<16x16xi1>, vector<16x16xf32>
    %cst_218 = arith.constant 1.41421354 : f32
    %566 = vector.broadcast %cst_218 : f32 to vector<16x16xf32>
    %567 = arith.mulf %565, %566 : vector<16x16xf32>
    %cst_219 = arith.constant -2.560000e+02 : f32
    %cst_220 = arith.constant 2.560000e+02 : f32
    %568 = vector.broadcast %cst_219 : f32 to vector<16x16xf32>
    %569 = arith.maximumf %568, %567 : vector<16x16xf32>
    %570 = vector.broadcast %cst_220 : f32 to vector<16x16xf32>
    %571 = arith.minimumf %570, %569 : vector<16x16xf32>
    %572 = vector.shape_cast %571 : vector<16x16xf32> to vector<1x16x16xf32>
    %c0_221 = arith.constant 0 : index
    %c0_222 = arith.constant 0 : index
    %c0_223 = arith.constant 0 : index
    %573 = vector.load %arg6[%c0_221, %c0_222, %c0_223] : memref<1x16x16xf32, #tpu.memory_space<vmem>>, vector<1x16x16xf32>
    tpu.vector_store %arg6[%c0_221, %c0_222, %c0_223], %572 {strides = array<i32>} : memref<1x16x16xf32, #tpu.memory_space<vmem>>, vector<1x16x16xf32>,
    %c384 = arith.constant 384 : index
    %c0_224 = arith.constant 0 : index
    %574 = vector.load %arg2[%c384, %c0_224] : memref<400x384xf32, #tpu.memory_space<vmem>>, vector<16x145xf32>
    %575 = tpu.iota {dimensions = array<i32: 1>} : vector<1x16xi32>
    %c3_i32_225 = arith.constant 3 : i32
    %576 = vector.broadcast %c3_i32_225 : i32 to vector<1x16xi32>
    %577 = arith.andi %575, %576 : vector<1x16xi32>
    %c3_i32_226 = arith.constant 3 : i32
    %578 = vector.broadcast %c3_i32_226 : i32 to vector<1x16xi32>
    %579 = arith.cmpi eq, %577, %578 : vector<1x16xi32>
    %cst_227 = arith.constant 0.000000e+00 : f32
    %cst_228 = arith.constant 1.000000e+00 : f32
    %580 = vector.broadcast %cst_227 : f32 to vector<1x16xf32>
    %581 = vector.broadcast %cst_228 : f32 to vector<1x16xf32>
    %582 = arith.select %579, %580, %581 : vector<1x16xi1>, vector<1x16xf32>
    %c0_i32_229 = arith.constant 0 : i32
    %583 = vector.broadcast %c0_i32_229 : i32 to vector<1x16xi32>
    %584 = arith.cmpi eq, %577, %583 : vector<1x16xi32>
    %cst_230 = arith.constant 0.000000e+00 : f32
    %cst_231 = arith.constant 1.000000e+00 : f32
    %585 = vector.broadcast %cst_230 : f32 to vector<1x16xf32>
    %586 = vector.broadcast %cst_231 : f32 to vector<1x16xf32>
    %587 = arith.select %584, %585, %586 : vector<1x16xi1>, vector<1x16xf32>
    %588 = vector.broadcast %582 : vector<1x16xf32> to vector<16x16xf32>
    %589 = arith.mulf %571, %588 : vector<16x16xf32>
    %590 = vector.broadcast %587 : vector<1x16xf32> to vector<16x16xf32>
    %591 = arith.mulf %571, %590 : vector<16x16xf32>
    %cst_232 = arith.constant 0.000000e+00 : f32
    %592 = vector.broadcast %cst_232 : f32 to vector<16x5xf32>
    %593 = vector.extract_strided_slice %589 {offsets = [0, 0], sizes = [16, 11], strides = [1, 1]} : vector<16x16xf32> to vector<16x11xf32>
    %594 = tpu.concatenate %592, %593 in 1 : vector<16x5xf32>, vector<16x11xf32> -> vector<16x16xf32>
    %cst_233 = arith.constant 0.000000e+00 : f32
    %595 = vector.broadcast %cst_233 : f32 to vector<16x4xf32>
    %596 = vector.extract_strided_slice %571 {offsets = [0, 0], sizes = [16, 12], strides = [1, 1]} : vector<16x16xf32> to vector<16x12xf32>
    %597 = tpu.concatenate %595, %596 in 1 : vector<16x4xf32>, vector<16x12xf32> -> vector<16x16xf32>
    %cst_234 = arith.constant 0.000000e+00 : f32
    %598 = vector.broadcast %cst_234 : f32 to vector<16x3xf32>
    %599 = vector.extract_strided_slice %591 {offsets = [0, 0], sizes = [16, 13], strides = [1, 1]} : vector<16x16xf32> to vector<16x13xf32>
    %600 = tpu.concatenate %598, %599 in 1 : vector<16x3xf32>, vector<16x13xf32> -> vector<16x16xf32>
    %cst_235 = arith.constant 0.000000e+00 : f32
    %601 = vector.broadcast %cst_235 : f32 to vector<16x1xf32>
    %602 = vector.extract_strided_slice %589 {offsets = [0, 0], sizes = [16, 15], strides = [1, 1]} : vector<16x16xf32> to vector<16x15xf32>
    %603 = tpu.concatenate %601, %602 in 1 : vector<16x1xf32>, vector<16x15xf32> -> vector<16x16xf32>
    %604 = vector.extract_strided_slice %591 {offsets = [0, 1], sizes = [16, 15], strides = [1, 1]} : vector<16x16xf32> to vector<16x15xf32>
    %cst_236 = arith.constant 0.000000e+00 : f32
    %605 = vector.broadcast %cst_236 : f32 to vector<16x1xf32>
    %606 = tpu.concatenate %604, %605 in 1 : vector<16x15xf32>, vector<16x1xf32> -> vector<16x16xf32>
    %607 = vector.extract_strided_slice %589 {offsets = [0, 3], sizes = [16, 13], strides = [1, 1]} : vector<16x16xf32> to vector<16x13xf32>
    %cst_237 = arith.constant 0.000000e+00 : f32
    %608 = vector.broadcast %cst_237 : f32 to vector<16x3xf32>
    %609 = tpu.concatenate %607, %608 in 1 : vector<16x13xf32>, vector<16x3xf32> -> vector<16x16xf32>
    %610 = vector.extract_strided_slice %571 {offsets = [0, 4], sizes = [16, 12], strides = [1, 1]} : vector<16x16xf32> to vector<16x12xf32>
    %cst_238 = arith.constant 0.000000e+00 : f32
    %611 = vector.broadcast %cst_238 : f32 to vector<16x4xf32>
    %612 = tpu.concatenate %610, %611 in 1 : vector<16x12xf32>, vector<16x4xf32> -> vector<16x16xf32>
    %613 = vector.extract_strided_slice %591 {offsets = [0, 5], sizes = [16, 11], strides = [1, 1]} : vector<16x16xf32> to vector<16x11xf32>
    %cst_239 = arith.constant 0.000000e+00 : f32
    %614 = vector.broadcast %cst_239 : f32 to vector<16x5xf32>
    %615 = tpu.concatenate %613, %614 in 1 : vector<16x11xf32>, vector<16x5xf32> -> vector<16x16xf32>
    %616 = tpu.concatenate %594, %597, %600, %603, %571, %606, %609, %612, %615 in 0 : vector<16x16xf32>, vector<16x16xf32>, vector<16x16xf32>, vector<16x16xf32>, vector<16x16xf32>, vector<16x16xf32>, vector<16x16xf32>, vector<16x16xf32>, vector<16x16xf32> -> vector<144x16xf32>
    %cst_240 = arith.constant 1.000000e+00 : f32
    %617 = vector.broadcast %cst_240 : f32 to vector<1x16xf32>
    %618 = tpu.concatenate %616, %617 in 0 : vector<144x16xf32>, vector<1x16xf32> -> vector<145x16xf32>
    %cst_241 = arith.constant dense<0.000000e+00> : vector<16x16xf32>
    %619 = tpu.matmul %574, %618, %cst_241 {dimension_numbers = #tpu.dot_dimension_numbers<[1], [0], [0], [1], [0, 0, 1, 1], [], []>} : vector<16x145xf32>, vector<145x16xf32>, vector<16x16xf32> -> vector<16x16xf32>
    %cst_242 = arith.constant 0.000000e+00 : f32
    %620 = vector.broadcast %cst_242 : f32 to vector<16x16xf32>
    %621 = arith.cmpf oge, %619, %620 : vector<16x16xf32>
    %cst_243 = arith.constant 2.000000e-01 : f32
    %622 = vector.broadcast %cst_243 : f32 to vector<16x16xf32>
    %623 = arith.mulf %622, %619 : vector<16x16xf32>
    %624 = arith.select %621, %619, %623 : vector<16x16xi1>, vector<16x16xf32>
    %cst_244 = arith.constant 1.41421354 : f32
    %625 = vector.broadcast %cst_244 : f32 to vector<16x16xf32>
    %626 = arith.mulf %624, %625 : vector<16x16xf32>
    %cst_245 = arith.constant -2.560000e+02 : f32
    %cst_246 = arith.constant 2.560000e+02 : f32
    %627 = vector.broadcast %cst_245 : f32 to vector<16x16xf32>
    %628 = arith.maximumf %627, %626 : vector<16x16xf32>
    %629 = vector.broadcast %cst_246 : f32 to vector<16x16xf32>
    %630 = arith.minimumf %629, %628 : vector<16x16xf32>
    %631 = vector.shape_cast %630 : vector<16x16xf32> to vector<1x16x16xf32>
    %c0_247 = arith.constant 0 : index
    %c0_248 = arith.constant 0 : index
    %c0_249 = arith.constant 0 : index
    %632 = vector.load %arg3[%c0_247, %c0_248, %c0_249] : memref<1x16x16xf32, #tpu.memory_space<vmem>>, vector<1x16x16xf32>
    tpu.vector_store %arg3[%c0_247, %c0_248, %c0_249], %631 {strides = array<i32>} : memref<1x16x16xf32, #tpu.memory_space<vmem>>, vector<1x16x16xf32>,
    return
  }
  func.func @transform_0(%arg0: i32) -> (i32, i32, i32) {
    %c0_i32 = arith.constant 0 : i32
    %c0_i32_0 = arith.constant 0 : i32
    %c0_i32_1 = arith.constant 0 : i32
    return %arg0, %c0_i32, %c0_i32_0 : i32, i32, i32
  }
  func.func @transform_1(%arg0: i32) -> (i32, i32) {
    %c0_i32 = arith.constant 0 : i32
    %c0_i32_0 = arith.constant 0 : i32
    %c0_i32_1 = arith.constant 0 : i32
    return %c0_i32, %c0_i32_0 : i32, i32
  }
  func.func @transform_2(%arg0: i32) -> (i32, i32, i32) {
    %c0_i32 = arith.constant 0 : i32
    %c0_i32_0 = arith.constant 0 : i32
    %c0_i32_1 = arith.constant 0 : i32
    return %arg0, %c0_i32, %c0_i32_0 : i32, i32, i32
  }
  func.func @transform_3(%arg0: i32) -> (i32, i32, i32) {
    %c0_i32 = arith.constant 0 : i32
    %c0_i32_0 = arith.constant 0 : i32
    %c0_i32_1 = arith.constant 0 : i32
    return %arg0, %c0_i32, %c0_i32_0 : i32, i32, i32
  }
  func.func @transform_4(%arg0: i32) -> (i32, i32, i32) {
    %c0_i32 = arith.constant 0 : i32
    %c0_i32_0 = arith.constant 0 : i32
    %c0_i32_1 = arith.constant 0 : i32
    return %arg0, %c0_i32, %c0_i32_0 : i32, i32, i32
  }
  func.func @transform_5(%arg0: i32) -> (i32, i32, i32) {
    %c0_i32 = arith.constant 0 : i32
    %c0_i32_0 = arith.constant 0 : i32
    %c0_i32_1 = arith.constant 0 : i32
    return %arg0, %c0_i32, %c0_i32_0 : i32, i32, i32
  }
}

</mosaic_0001>

<llo_original>
// kernel: encoder_forward.1
$region0: #{encoder_forward.1}
  #allocation0 [shape = 'u32[]', space=smem, size = 0x4, offset = 0x4, fixed_abs, tag = 'smem constant byte address 0x4 - core index']
  #allocation1 [shape = 'u32[72,128]{1,0:T(1,128)}', space=vmem, size = 0x9000, scoped, tag = 'internal scratch']
  %s0 = inlined_call_operand.vmem [shape: f32[2,3,256], index: 0, kind: input, shape index: {}]
  %s1 = inlined_call_operand.hbm [shape: f32[400,384], index: 1, kind: input, shape index: {}]
  %s2 = inlined_call_operand.vmem [shape: f32[2,16,16], index: 2, kind: output, shape index: {0}]
  %s3 = inlined_call_operand.vmem [shape: f32[2,4,256], index: 3, kind: output, shape index: {1}]
  %s4 = inlined_call_operand.vmem [shape: f32[2,8,64], index: 4, kind: output, shape index: {2}]
  %s5 = inlined_call_operand.vmem [shape: f32[2,16,16], index: 5, kind: output, shape index: {3}]
  %6 = xla_tuple %s2, %s3, %s4, %s5
  %s7 = sld [smem:[#allocation0]]
  $region69: #{encoder_forward.1} parent=0
    _
  %s9 = ssub.s32 1, %s7
  %s10 = scalar_select 0, %s9, %s7
  $region1: #{encoder_forward.1} parent=0
    #allocation2 [shape = 'u8[614400]{0}', space=vmem, size = 0x96000, scoped, tag = 'input window, operand 1, single buffered']
    #allocation3 [shape = 's32[2]{0}', space=sflag, size = 0x8, scoped, tag = 'scoped memory for encoder_forward.1']
    %11 = vsyncpa [#allocation3], 0
    loop: start=0, step=1, limit=4
    $region2: #{encoder_forward.1} parent=1 // loop_pre_header
      _
    $region3: #{encoder_forward.1} parent=1 // loop_header
      %s13 = sphi 0, %s17
      %p14 = scmp.ge.s32.totalorder %s13, 4
      %s23 = sphi 0, %s25
      %s26 = sphi 0, %s23
      %s27 = sphi 0, %s26
      %s43 = sphi 0, %s27
      %s47 = sphi 0, %s47
      %s49 = sphi 0, %s47
      %s50 = sphi 0, %s49
      %s64 = sphi 0, %s50
      %s70 = sphi 0, %s72
      %s73 = sphi 0, %s70
      %s74 = sphi 0, %s73
      %s90 = sphi 0, %s74
      %s96 = sphi 0, %s98
      %s99 = sphi 0, %s96
      %s100 = sphi 0, %s99
      %s116 = sphi 0, %s100
      %s122 = sphi 0, %s124
      %s125 = sphi 0, %s122
      %s126 = sphi 0, %s125
      %s142 = sphi 0, %s126
      %s148 = sphi 0, %s150
      %s151 = sphi 0, %s148
      %s152 = sphi 0, %s151
      %s168 = sphi 0, %s152
    $region4: #{encoder_forward.1} parent=1 // loop_header_branch
      %16 = sbr.rel (%p14) target = $region8
    $region5: #{encoder_forward.1} parent=1 // loop_body
      %s18 = ssub.s32 %s13, 1
      %s19 = ssub.s32 %s13, 2
      %s20 = sadd.s32 %s13, 1
      %s21 = ssub.s32 %s13, %s20
      %p22 = scmp.eq.s32.totalorder %s21, 0
      %s24 = sadd.s32 %s23, 1
      %s25 = scalar_select %p22, %s23, %s24
      %p28 = pneg %p22
      %p29 = scmp.eq.s32.totalorder %s13, 1
      %p30 = por %p28, %p29
      %p31 = scmp.ne.s32.totalorder %s23, %s26
      %p32 = scmp.eq.s32.totalorder %s13, 0
      %p33 = por %p31, %p32
      %p34 = scmp.ne.s32.totalorder %s23, %s26
      %p35 = scmp.eq.s32.totalorder %s18, 1
      %p36 = por %p34, %p35
      %p37 = scmp.ne.s32.totalorder %s26, %s27
      %p38 = scmp.eq.s32.totalorder %s18, 0
      %p39 = por %p37, %p38
      %p40 = scmp.ne.s32.totalorder %s26, %s27
      %p41 = scmp.eq.s32.totalorder %s19, 1
      %p42 = por %p40, %p41
      %p44 = scmp.ne.s32.totalorder %s27, %s43
      %p45 = scmp.eq.s32.totalorder %s19, 0
      %p46 = por %p44, %p45
      %s48 = sadd.s32 %s47, 1
      %p51 = scmp.eq.s32.totalorder %s13, 1
      %p52 = scmp.ne.s32.totalorder %s47, %s49
      %p53 = scmp.eq.s32.totalorder %s13, 0
      %p54 = por %p52, %p53
      %p55 = scmp.ne.s32.totalorder %s47, %s49
      %p56 = scmp.eq.s32.totalorder %s18, 1
      %p57 = por %p55, %p56
      %p58 = scmp.ne.s32.totalorder %s49, %s50
      %p59 = scmp.eq.s32.totalorder %s18, 0
      %p60 = por %p58, %p59
      %p61 = scmp.ne.s32.totalorder %s49, %s50
      %p62 = scmp.eq.s32.totalorder %s19, 1
      %p63 = por %p61, %p62
      %p65 = scmp.ne.s32.totalorder %s50, %s64
      %p66 = scmp.eq.s32.totalorder %s19, 0
      %p67 = por %p65, %p66
      %s68 = ssub.s32 %s13, %s20
      %p69 = scmp.eq.s32.totalorder %s68, 0
      %s71 = sadd.s32 %s70, 1
      %s72 = scalar_select %p69, %s70, %s71
      %p75 = pneg %p69
      %p76 = scmp.eq.s32.totalorder %s13, 1
      %p77 = por %p75, %p76
      %p78 = scmp.ne.s32.totalorder %s70, %s73
      %p79 = scmp.eq.s32.totalorder %s13, 0
      %p80 = por %p78, %p79
      %p81 = scmp.ne.s32.totalorder %s70, %s73
      %p82 = scmp.eq.s32.totalorder %s18, 1
      %p83 = por %p81, %p82
      %p84 = scmp.ne.s32.totalorder %s73, %s74
      %p85 = scmp.eq.s32.totalorder %s18, 0
      %p86 = por %p84, %p85
      %p87 = scmp.ne.s32.totalorder %s73, %s74
      %p88 = scmp.eq.s32.totalorder %s19, 1
      %p89 = por %p87, %p88
      %p91 = scmp.ne.s32.totalorder %s74, %s90
      %p92 = scmp.eq.s32.totalorder %s19, 0
      %p93 = por %p91, %p92
      %s94 = ssub.s32 %s13, %s20
      %p95 = scmp.eq.s32.totalorder %s94, 0
      %s97 = sadd.s32 %s96, 1
      %s98 = scalar_select %p95, %s96, %s97
      %p101 = pneg %p95
      %p102 = scmp.eq.s32.totalorder %s13, 1
      %p103 = por %p101, %p102
      %p104 = scmp.ne.s32.totalorder %s96, %s99
      %p105 = scmp.eq.s32.totalorder %s13, 0
      %p106 = por %p104, %p105
      %p107 = scmp.ne.s32.totalorder %s96, %s99
      %p108 = scmp.eq.s32.totalorder %s18, 1
      %p109 = por %p107, %p108
      %p110 = scmp.ne.s32.totalorder %s99, %s100
      %p111 = scmp.eq.s32.totalorder %s18, 0
      %p112 = por %p110, %p111
      %p113 = scmp.ne.s32.totalorder %s99, %s100
      %p114 = scmp.eq.s32.totalorder %s19, 1
      %p115 = por %p113, %p114
      %p117 = scmp.ne.s32.totalorder %s100, %s116
      %p118 = scmp.eq.s32.totalorder %s19, 0
      %p119 = por %p117, %p118
      %s120 = ssub.s32 %s13, %s20
      %p121 = scmp.eq.s32.totalorder %s120, 0
      %s123 = sadd.s32 %s122, 1
      %s124 = scalar_select %p121, %s122, %s123
      %p127 = pneg %p121
      %p128 = scmp.eq.s32.totalorder %s13, 1
      %p129 = por %p127, %p128
      %p130 = scmp.ne.s32.totalorder %s122, %s125
      %p131 = scmp.eq.s32.totalorder %s13, 0
      %p132 = por %p130, %p131
      %p133 = scmp.ne.s32.totalorder %s122, %s125
      %p134 = scmp.eq.s32.totalorder %s18, 1
      %p135 = por %p133, %p134
      %p136 = scmp.ne.s32.totalorder %s125, %s126
      %p137 = scmp.eq.s32.totalorder %s18, 0
      %p138 = por %p136, %p137
      %p139 = scmp.ne.s32.totalorder %s125, %s126
      %p140 = scmp.eq.s32.totalorder %s19, 1
      %p141 = por %p139, %p140
      %p143 = scmp.ne.s32.totalorder %s126, %s142
      %p144 = scmp.eq.s32.totalorder %s19, 0
      %p145 = por %p143, %p144
      %s146 = ssub.s32 %s13, %s20
      %p147 = scmp.eq.s32.totalorder %s146, 0
      %s149 = sadd.s32 %s148, 1
      %s150 = scalar_select %p147, %s148, %s149
      %p153 = pneg %p147
      %p154 = scmp.eq.s32.totalorder %s13, 1
      %p155 = por %p153, %p154
      %p156 = scmp.ne.s32.totalorder %s148, %s151
      %p157 = scmp.eq.s32.totalorder %s13, 0
      %p158 = por %p156, %p157
      %p159 = scmp.ne.s32.totalorder %s148, %s151
      %p160 = scmp.eq.s32.totalorder %s18, 1
      %p161 = por %p159, %p160
      %p162 = scmp.ne.s32.totalorder %s151, %s152
      %p163 = scmp.eq.s32.totalorder %s18, 0
      %p164 = por %p162, %p163
      %p165 = scmp.ne.s32.totalorder %s151, %s152
      %p166 = scmp.eq.s32.totalorder %s19, 1
      %p167 = por %p165, %p166
      %p169 = scmp.ne.s32.totalorder %s152, %s168
      %p170 = scmp.eq.s32.totalorder %s19, 0
      %p171 = por %p169, %p170
      %p172 = scmp.le.s32.totalorder 1, %s13
      %p173 = scmp.lt.s32.totalorder %s13, 3
      %p174 = pnand %p172, %p173
      %p175 = pneg %p174
      // Predicated region
      $region9: #{encoder_forward.1} parent=5 // pred_check
        _
      $region10: #{encoder_forward.1} parent=5 // pred_check_branch
        %177 = sbr.rel (%p174) target = $region12
      $region11: #{encoder_forward.1} parent=5 // pred_region
        %s178 = ssub.s32 %s13, 1
        // Predicated region
        $region13: #{encoder_forward.1} parent=11 // pred_check
          %p179 = pneg %p60
        $region14: #{encoder_forward.1} parent=11 // pred_check_branch
          %181 = sbr.rel (%p179) target = $region16
        $region15: #{encoder_forward.1} parent=11 // pred_region
          %183 = vsyncadd [#allocation3], 0
          %s184 = sshll.u32 %s1, 4
          %s185 = int_to_ptr.hbm [resolvable:$true] %s184
          %s186 = sshll.u32 [#allocation2], 4
          %s187 = int_to_ptr.vmem [resolvable:$true] %s186
          %192 = dma.hbm_to_vmem [thread:$0]  %s185, 19200, %s187, [#allocation3], 384, 384, 24
        $region16: #{encoder_forward.1} parent=11 // pred_fallthru
          _
      $region12: #{encoder_forward.1} parent=5 // pred_fallthru
        _
      %p193 = scmp.lt.s32.totalorder %s13, 2
      // Predicated region
      $region17: #{encoder_forward.1} parent=5 // pred_check
        %p194 = pneg %p193
      $region18: #{encoder_forward.1} parent=5 // pred_check_branch
        %196 = sbr.rel (%p194) target = $region20
      $region19: #{encoder_forward.1} parent=5 // pred_region
        // Predicated region
        $region21: #{encoder_forward.1} parent=19 // pred_check
          %p197 = pneg %p33
        $region22: #{encoder_forward.1} parent=19 // pred_check_branch
          %199 = sbr.rel (%p197) target = $region24
        $region23: #{encoder_forward.1} parent=19 // pred_region
          %p200 = scmp.lt.s32.totalorder %s13, 1
          %s201 = scalar_select %p200, %s13, 1
          %s202 = smul.addr %s201, 2
          %s203 = smul.addr %s202, 4
          %s204 = scalar_lea.vmem %s0, %s203
        $region24: #{encoder_forward.1} parent=19 // pred_fallthru
          _
      $region20: #{encoder_forward.1} parent=5 // pred_fallthru
        _
      %p205 = scmp.le.s32.totalorder 1, %s13
      %p206 = scmp.lt.s32.totalorder %s13, 3
      %p207 = pnand %p205, %p206
      %p208 = pneg %p207
      // Predicated region
      $region25: #{encoder_forward.1} parent=5 // pred_check
        _
      $region26: #{encoder_forward.1} parent=5 // pred_check_branch
        %210 = sbr.rel (%p207) target = $region28
      $region27: #{encoder_forward.1} parent=5 // pred_region
        %s211 = ssub.s32 %s13, 1
        // Predicated region
        $region29: #{encoder_forward.1} parent=27 // pred_check
          %p212 = pneg %p60
        $region30: #{encoder_forward.1} parent=27 // pred_check_branch
          %214 = sbr.rel (%p212) target = $region32
        $region31: #{encoder_forward.1} parent=27 // pred_region
          %216 = dma.done [#allocation3], 19200
        $region32: #{encoder_forward.1} parent=27 // pred_fallthru
          _
        %p217 = scmp.lt.s32.totalorder %s18, 1
        %s218 = scalar_select %p217, %s18, 1
        %s219 = smul.addr %s218, 2
        %s220 = smul.addr %s219, 4
        %s221 = scalar_lea.vmem %s0, %s220
        %p222 = pneg %p39
        %p223 = pneg %p36
        %p224 = pneg %p60
        %p225 = pneg %p57
        %p226 = pneg %p86
        %p227 = pneg %p83
        %p228 = scmp.lt.s32.totalorder %s18, 1
        %s229 = scalar_select %p228, %s18, 1
        %s230 = smul.addr %s229, 2
        %s231 = smul.addr %s230, 8
        %s232 = scalar_lea.vmem %s2, %s231
        %p233 = pneg %p112
        %p234 = pneg %p109
        %p235 = scmp.lt.s32.totalorder %s18, 1
        %s236 = scalar_select %p235, %s18, 1
        %s237 = smul.addr %s236, 2
        %s238 = smul.addr %s237, 4
        %s239 = scalar_lea.vmem %s3, %s238
        %p240 = pneg %p138
        %p241 = pneg %p135
        %p242 = scmp.lt.s32.totalorder %s18, 1
        %s243 = scalar_select %p242, %s18, 1
        %s244 = smul.addr %s243, 8
        %s245 = scalar_lea.vmem %s4, %s244
        %p246 = pneg %p164
        %p247 = pneg %p161
        %p248 = scmp.lt.s32.totalorder %s18, 1
        %s249 = scalar_select %p248, %s18, 1
        %s250 = smul.addr %s249, 2
        %s251 = smul.addr %s250, 8
        %s252 = scalar_lea.vmem %s5, %s251
        %p253 = scmp.lt.s32.totalorder %s18, 1
        %s254 = scalar_select %p253, %s18, 1
        %s255 = smul.addr %s254, 2
        %s256 = smul.addr %s255, 4
        %s257 = scalar_lea.vmem %s0, %s256
        %p258 = scmp.lt.s32.totalorder %s18, 1
        %s259 = scalar_select %p258, %s18, 1
        %s260 = smul.addr %s259, 2
        %s261 = smul.addr %s260, 8
        %s262 = scalar_lea.vmem %s2, %s261
        %p263 = scmp.lt.s32.totalorder %s18, 1
        %s264 = scalar_select %p263, %s18, 1
        %s265 = smul.addr %s264, 2
        %s266 = smul.addr %s265, 4
        %s267 = scalar_lea.vmem %s3, %s266
        %p268 = scmp.lt.s32.totalorder %s18, 1
        %s269 = scalar_select %p268, %s18, 1
        %s270 = smul.addr %s269, 8
        %s271 = scalar_lea.vmem %s4, %s270
        %p272 = scmp.lt.s32.totalorder %s18, 1
        %s273 = scalar_select %p272, %s18, 1
        %s274 = smul.addr %s273, 2
        %s275 = smul.addr %s274, 8
        %s276 = scalar_lea.vmem %s5, %s275
        %v277 = vld [vmem:[%s257] sm:$0x77]
        %v278 = vld [vmem:[#allocation2] sm:$0xf]
        %280 = vst [vmem:[#allocation1] ss:$2 sm:$0xff] %v277
        %v281 = vld.sshfl [vmem:[#allocation1] sm:$0xff pattern:$0x75316420]
        %v282 = vld.sshfl [vmem:[#allocation1 + $0x8] sm:$0xff pattern:$0x75316420]
        %vm285 = vcmask 1042432
        %v286 = vsel %vm285, %v281, 1.0
        %v287 = vsel %vm285, %v282, 1.0
        %vm288 = vcmask 31744
        %v290 = vsel %vm288, %v278, 0
        %vm292 = vcmask 1043456
        %v294 = vsel %vm292, %v286, 0
        %v297 = vsel %vm292, %v287, 0
        %299 = vmatpush.msra.mxu0 0.0
        %300 = vmatpush.msra.mxu0 0.0
        %301 = vmatpush.msra.mxu0 0.0
        %302 = vmatpush.msra.mxu0 0.0
        %303 = vmatpush.msra.mxu0 0.0
        %304 = vmatpush.msra.mxu0 0.0
        %305 = vmatpush.msra.mxu0 0.0
        %306 = vmatpush.msra.mxu0 0.0
        %307 = vmatpush.msra.mxu0 0.0
        %308 = vmatpush.msra.mxu0 0.0
        %309 = vmatpush.msra.mxu0 0.0
        %310 = vmatpush.msra.mxu0 0.0
        %311 = vmatpush.msra.mxu0 0.0
        %312 = vmatpush.msra.mxu0 0.0
        %313 = vmatpush.msra.mxu0 0.0
        %314 = vmatpush.msra.mxu0 %v294
        %315 = vmatmul.f32.gmra.mxu0 %v290
        %v316 = vpop.f32.mrf.mxu0
        %v317 = vadd.f32 0.0, %v316
        %318 = vdwg.mxu0
        %319 = vmatpush.msra.mxu0 0.0
        %320 = vmatpush.msra.mxu0 0.0
        %321 = vmatpush.msra.mxu0 0.0
        %322 = vmatpush.msra.mxu0 0.0
        %323 = vmatpush.msra.mxu0 0.0
        %324 = vmatpush.msra.mxu0 0.0
        %325 = vmatpush.msra.mxu0 0.0
        %326 = vmatpush.msra.mxu0 0.0
        %327 = vmatpush.msra.mxu0 0.0
        %328 = vmatpush.msra.mxu0 0.0
        %329 = vmatpush.msra.mxu0 0.0
        %330 = vmatpush.msra.mxu0 0.0
        %331 = vmatpush.msra.mxu0 0.0
        %332 = vmatpush.msra.mxu0 0.0
        %333 = vmatpush.msra.mxu0 0.0
        %334 = vmatpush.msra.mxu0 %v297
        %335 = vmatmul.f32.gmra.mxu0 %v290
        %v336 = vpop.f32.mrf.mxu0
        %v337 = vadd.f32 0.0, %v336
        %338 = vdwg.mxu0
        %vm339 = vcmp.ge.f32.partialorder %v317, 0.0
        %vm340 = vcmp.ge.f32.partialorder %v337, 0.0
        %v341 = vmul.f32 %v317, 0.2
        %v342 = vmul.f32 %v337, 0.2
        %v343 = vsel %vm339, %v317, %v341
        %v344 = vsel %vm340, %v337, %v342
        %v345 = vmul.f32 %v343, 1.4142135
        %v346 = vmul.f32 %v344, 1.4142135
        %v347 = vmax.f32 %v345, -256.0
        %v348 = vmax.f32 %v346, -256.0
        %v349 = vmin.f32 %v347, 256.0
        %v350 = vmin.f32 %v348, 256.0
        %v351 = vld [vmem:[#allocation2 + $0x18] sm:$0xf]
        %v352 = vlaneseq
        %v353 = vand.u32 %v352, 127
        %v354 = vadd.s32 %v353, 128
        %v355 = vand.u32 %v353, 15
        %v356 = vand.u32 %v354, 15
        %vm357 = vcmp.eq.s32.totalorder %v355, 15
        %vm358 = vcmp.eq.s32.totalorder %v356, 15
        %v359 = vsel %vm357, 0.0, 1.0
        %v360 = vsel %vm358, 0.0, 1.0
        %vm361 = vcmp.eq.s32.totalorder %v355, 0
        %vm362 = vcmp.eq.s32.totalorder %v356, 0
        %v363 = vsel %vm361, 0.0, 1.0
        %v364 = vsel %vm362, 0.0, 1.0
        %v365 = vmul.f32 %v349, %v359
        %v366 = vmul.f32 %v350, %v360
        %v367 = vmul.f32 %v349, %v363
        %v368 = vmul.f32 %v350, %v364
        %371 = vrot.lane.b32.xlu0 %v365, 17
        %v372 = vpop.permute.xlu0 %371
        %373 = vrot.lane.b32.xlu0 %v366, 17
        %v374 = vpop.permute.xlu0 %373
        %vm375 = vcmask 138240
        %v376 = vsel %vm375, %v372, %v374
        %v379 = vsel %vm375, 0.0, %v372
        %382 = vrot.lane.b32.xlu0 %v349, 16
        %v383 = vpop.permute.xlu0 %382
        %384 = vrot.lane.b32.xlu0 %v350, 16
        %v385 = vpop.permute.xlu0 %384
        %vm386 = vcmask 130048
        %v387 = vsel %vm386, %v383, %v385
        %v389 = vsel %vm386, 0.0, %v383
        %392 = vrot.lane.b32.xlu0 %v367, 15
        %v393 = vpop.permute.xlu0 %392
        %394 = vrot.lane.b32.xlu0 %v368, 15
        %v395 = vpop.permute.xlu0 %394
        %vm396 = vcmask 121856
        %v397 = vsel %vm396, %v393, %v395
        %v400 = vsel %vm396, 0.0, %v393
        %401 = vrot.lane.b32.xlu0 %v365, 1
        %v402 = vpop.permute.xlu0 %401
        %403 = vrot.lane.b32.xlu0 %v366, 1
        %v404 = vpop.permute.xlu0 %403
        %vm405 = vcmask 7168
        %v406 = vsel %vm405, %v402, %v404
        %v408 = vsel %vm405, 0.0, %v402
        %409 = vrot.lane.b32.xlu0 %v367, 127
        %v410 = vpop.permute.xlu0 %409
        %411 = vrot.lane.b32.xlu0 %v368, 127
        %v412 = vpop.permute.xlu0 %411
        %vm413 = vcmask 1039360
        %v414 = vsel %vm413, %v410, %v412
        %v416 = vsel %vm413, %v412, 0.0
        %417 = vrot.lane.b32.xlu0 %v365, 113
        %v418 = vpop.permute.xlu0 %417
        %419 = vrot.lane.b32.xlu0 %v366, 113
        %v420 = vpop.permute.xlu0 %419
        %vm421 = vcmask 924672
        %v422 = vsel %vm421, %v418, %v420
        %v425 = vsel %vm421, %v420, 0.0
        %426 = vrot.lane.b32.xlu0 %v349, 112
        %v427 = vpop.permute.xlu0 %426
        %428 = vrot.lane.b32.xlu0 %v350, 112
        %v429 = vpop.permute.xlu0 %428
        %vm430 = vcmask 916480
        %v431 = vsel %vm430, %v427, %v429
        %v433 = vsel %vm430, %v429, 0.0
        %434 = vrot.lane.b32.xlu0 %v367, 111
        %v435 = vpop.permute.xlu0 %434
        %436 = vrot.lane.b32.xlu0 %v368, 111
        %v437 = vpop.permute.xlu0 %436
        %vm438 = vcmask 908288
        %v439 = vsel %vm438, %v435, %v437
        %v442 = vsel %vm438, %v437, 0.0
        %v444 = vrot.slane %v389, 4
        %v445 = vrot.slane %v387, 4
        %v449 = vrot.slane %v408, 4
        %v450 = vrot.slane %v406, 4
        %v454 = vrot.slane %v414, 4
        %v455 = vrot.slane %v416, 4
        %v459 = vrot.slane %v431, 4
        %v460 = vrot.slane %v433, 4
        %v463 = vsel %vm292, %v379, %v444
        %v464 = vsel %vm292, %v376, %v445
        %v465 = vsel %vm292, %v400, %v449
        %v466 = vsel %vm292, %v397, %v450
        %v467 = vsel %vm292, %v349, %v454
        %v468 = vsel %vm292, %v350, %v455
        %v469 = vsel %vm292, %v422, %v459
        %v470 = vsel %vm292, %v425, %v460
        %v471 = vsel %vm292, %v439, 1.0
        %v472 = vsel %vm292, %v442, 1.0
        %vm473 = vcmask 302080
        %v475 = vsel %vm473, %v351, 0
        %vm477 = vcmask 1044480
        %v479 = vsel %vm477, %v471, 0
        %v482 = vsel %vm477, %v472, 0
        %484 = vmatpush.msra.mxu0 0.0
        %485 = vmatpush.msra.mxu0 0.0
        %486 = vmatpush.msra.mxu0 0.0
        %487 = vmatpush.msra.mxu0 0.0
        %488 = vmatpush.msra.mxu0 0.0
        %489 = vmatpush.msra.mxu0 0.0
        %490 = vmatpush.msra.mxu0 0.0
        %491 = vmatpush.msra.mxu0 0.0
        %492 = vmatpush.msra.mxu0 0.0
        %493 = vmatpush.msra.mxu0 0.0
        %494 = vmatpush.msra.mxu0 0.0
        %495 = vmatpush.msra.mxu0 %v479
        %496 = vmatpush.msra.mxu0 %v469
        %497 = vmatpush.msra.mxu0 %v467
        %498 = vmatpush.msra.mxu0 %v465
        %499 = vmatpush.msra.mxu0 %v463
        %500 = vmatmul.f32.gmra.mxu0 %v475
        %v501 = vpop.f32.mrf.mxu0
        %v502 = vadd.f32 0.0, %v501
        %503 = vdwg.mxu0
        %504 = vmatpush.msra.mxu0 0.0
        %505 = vmatpush.msra.mxu0 0.0
        %506 = vmatpush.msra.mxu0 0.0
        %507 = vmatpush.msra.mxu0 0.0
        %508 = vmatpush.msra.mxu0 0.0
        %509 = vmatpush.msra.mxu0 0.0
        %510 = vmatpush.msra.mxu0 0.0
        %511 = vmatpush.msra.mxu0 0.0
        %512 = vmatpush.msra.mxu0 0.0
        %513 = vmatpush.msra.mxu0 0.0
        %514 = vmatpush.msra.mxu0 0.0
        %515 = vmatpush.msra.mxu0 %v482
        %516 = vmatpush.msra.mxu0 %v470
        %517 = vmatpush.msra.mxu0 %v468
        %518 = vmatpush.msra.mxu0 %v466
        %519 = vmatpush.msra.mxu0 %v464
        %520 = vmatmul.f32.gmra.mxu0 %v475
        %v521 = vpop.f32.mrf.mxu0
        %v522 = vadd.f32 0.0, %v521
        %523 = vdwg.mxu0
        %vm524 = vcmp.ge.f32.partialorder %v502, 0.0
        %vm525 = vcmp.ge.f32.partialorder %v522, 0.0
        %v526 = vmul.f32 %v502, 0.2
        %v527 = vmul.f32 %v522, 0.2
        %v528 = vsel %vm524, %v502, %v526
        %v529 = vsel %vm525, %v522, %v527
        %v530 = vmul.f32 %v528, 1.4142135
        %v531 = vmul.f32 %v529, 1.4142135
        %v532 = vmax.f32 %v530, -256.0
        %v533 = vmax.f32 %v531, -256.0
        %v534 = vmin.f32 %v532, 256.0
        %v535 = vmin.f32 %v533, 256.0
        %v538 = vrot.slane %v535, 4
        %v539 = vsel %vm292, %v534, %v538
        %541 = vst [vmem:[%s267] sm:$0xff] %v539
        %v542 = vld [vmem:[#allocation2 + $0x30] sm:$0xff]
        %v543 = vld [vmem:[#allocation2 + $0x38] sm:$0xff]
        %v544 = vld [vmem:[#allocation2 + $0x48] sm:$0xff]
        %v545 = vld [vmem:[#allocation2 + $0x50] sm:$0xff]
        %v546 = vld [vmem:[#allocation2 + $0x60] sm:$0xff]
        %v547 = vld [vmem:[#allocation2 + $0x68] sm:$0xff]
        %v548 = vld [vmem:[#allocation2 + $0x78] sm:$0xff]
        %v549 = vld [vmem:[#allocation2 + $0x80] sm:$0xff]
        %v550 = vld [vmem:[#allocation2 + $0x90] sm:$0xff]
        %v551 = vld [vmem:[#allocation2 + $0x98] sm:$0xff]
        %v552 = vld [vmem:[#allocation2 + $0xa8] sm:$0xff]
        %v553 = vld [vmem:[#allocation2 + $0xb0] sm:$0xff]
        %v554 = vld [vmem:[#allocation2 + $0xc0] sm:$0xff]
        %v555 = vld [vmem:[#allocation2 + $0xc8] sm:$0xff]
        %v556 = vld [vmem:[#allocation2 + $0xd8] sm:$0xff]
        %v557 = vld [vmem:[#allocation2 + $0xe0] sm:$0xff]
        %v558 = vld [vmem:[#allocation2 + $0xf0] sm:$0xff]
        %v559 = vld [vmem:[#allocation2 + $0xf8] sm:$0xff]
        %v560 = vld [vmem:[#allocation2 + $0x108] sm:$0xff]
        %v561 = vld [vmem:[#allocation2 + $0x110] sm:$0xff]
        %v562 = vld [vmem:[#allocation2 + $0x120] sm:$0xff]
        %v563 = vld [vmem:[#allocation2 + $0x128] sm:$0xff]
        %v564 = vld [vmem:[#allocation2 + $0x138] sm:$0xff]
        %v565 = vld [vmem:[#allocation2 + $0x140] sm:$0xff]
        %v566 = vld [vmem:[#allocation2 + $0x150] sm:$0xff]
        %v567 = vld [vmem:[#allocation2 + $0x158] sm:$0xff]
        %v568 = vld [vmem:[#allocation2 + $0x168] sm:$0xff]
        %v569 = vld [vmem:[#allocation2 + $0x170] sm:$0xff]
        %v570 = vld [vmem:[#allocation2 + $0x180] sm:$0xff]
        %v571 = vld [vmem:[#allocation2 + $0x188] sm:$0xff]
        %v572 = vld [vmem:[#allocation2 + $0x198] sm:$0xff]
        %v573 = vld [vmem:[#allocation2 + $0x1a0] sm:$0xff]
        %v574 = vld [vmem:[#allocation2 + $0x1b0] sm:$0xff]
        %v575 = vld [vmem:[#allocation2 + $0x1b8] sm:$0xff]
        %v576 = vld [vmem:[#allocation2 + $0x1c8] sm:$0xff]
        %v577 = vld [vmem:[#allocation2 + $0x1d0] sm:$0xff]
        %v578 = vld [vmem:[#allocation2 + $0x1e0] sm:$0xff]
        %v579 = vld [vmem:[#allocation2 + $0x1e8] sm:$0xff]
        %v580 = vld [vmem:[#allocation2 + $0x1f8] sm:$0xff]
        %v581 = vld [vmem:[#allocation2 + $0x200] sm:$0xff]
        %v582 = vld [vmem:[#allocation2 + $0x210] sm:$0xff]
        %v583 = vld [vmem:[#allocation2 + $0x218] sm:$0xff]
        %v584 = vld [vmem:[#allocation2 + $0x228] sm:$0xff]
        %v585 = vld [vmem:[#allocation2 + $0x230] sm:$0xff]
        %v586 = vld [vmem:[#allocation2 + $0x240] sm:$0xff]
        %v587 = vld [vmem:[#allocation2 + $0x248] sm:$0xff]
        %v588 = vld [vmem:[#allocation2 + $0x258] sm:$0xff]
        %v589 = vld [vmem:[#allocation2 + $0x260] sm:$0xff]
        %v590 = vld [vmem:[#allocation2 + $0x270] sm:$0xff]
        %v591 = vld [vmem:[#allocation2 + $0x278] sm:$0xff]
        %v592 = vld [vmem:[#allocation2 + $0x288] sm:$0xff]
        %v593 = vld [vmem:[#allocation2 + $0x290] sm:$0xff]
        %v594 = vld [vmem:[#allocation2 + $0x2a0] sm:$0xff]
        %v595 = vld [vmem:[#allocation2 + $0x2a8] sm:$0xff]
        %v596 = vld [vmem:[#allocation2 + $0x2b8] sm:$0xff]
        %v597 = vld [vmem:[#allocation2 + $0x2c0] sm:$0xff]
        %v598 = vld [vmem:[#allocation2 + $0x2d0] sm:$0xff]
        %v599 = vld [vmem:[#allocation2 + $0x2d8] sm:$0xff]
        %v600 = vld [vmem:[#allocation2 + $0x2e8] sm:$0xff]
        %v601 = vld [vmem:[#allocation2 + $0x2f0] sm:$0xff]
        %v602 = vld [vmem:[#allocation2 + $0x300] sm:$0xff]
        %v603 = vld [vmem:[#allocation2 + $0x308] sm:$0xff]
        %v604 = vld [vmem:[#allocation2 + $0x318] sm:$0xff]
        %v605 = vld [vmem:[#allocation2 + $0x320] sm:$0xff]
        %606 = vmatpush.msra.mxu0 %v572
        %607 = vmatpush.msra.mxu0 %v570
        %608 = vmatpush.msra.mxu0 %v568
        %609 = vmatpush.msra.mxu0 %v566
        %610 = vmatpush.msra.mxu0 %v564
        %611 = vmatpush.msra.mxu0 %v562
        %612 = vmatpush.msra.mxu0 %v560
        %613 = vmatpush.msra.mxu0 %v558
        %614 = vmatpush.msra.mxu0 %v556
        %615 = vmatpush.msra.mxu0 %v554
        %616 = vmatpush.msra.mxu0 %v552
        %617 = vmatpush.msra.mxu0 %v550
        %618 = vmatpush.msra.mxu0 %v548
        %619 = vmatpush.msra.mxu0 %v546
        %620 = vmatpush.msra.mxu0 %v544
        %621 = vmatpush.msra.mxu0 %v542
        %622 = vmatmul.f32.gmra.mxu0 %v534
        %v623 = vpop.f32.mrf.mxu0
        %v624 = vadd.f32 0.0, %v623
        %625 = vdwg.mxu0
        %626 = vmatpush.msra.mxu0 %v604
        %627 = vmatpush.msra.mxu0 %v602
        %628 = vmatpush.msra.mxu0 %v600
        %629 = vmatpush.msra.mxu0 %v598
        %630 = vmatpush.msra.mxu0 %v596
        %631 = vmatpush.msra.mxu0 %v594
        %632 = vmatpush.msra.mxu0 %v592
        %633 = vmatpush.msra.mxu0 %v590
        %634 = vmatpush.msra.mxu0 %v588
        %635 = vmatpush.msra.mxu0 %v586
        %636 = vmatpush.msra.mxu0 %v584
        %637 = vmatpush.msra.mxu0 %v582
        %638 = vmatpush.msra.mxu0 %v580
        %639 = vmatpush.msra.mxu0 %v578
        %640 = vmatpush.msra.mxu0 %v576
        %641 = vmatpush.msra.mxu0 %v574
        %642 = vmatmul.f32.gmra.mxu0 %v535
        %v643 = vpop.f32.mrf.mxu0
        %v644 = vadd.f32 %v624, %v643
        %645 = vdwg.mxu0
        %646 = vmatpush.msra.mxu0 %v573
        %647 = vmatpush.msra.mxu0 %v571
        %648 = vmatpush.msra.mxu0 %v569
        %649 = vmatpush.msra.mxu0 %v567
        %650 = vmatpush.msra.mxu0 %v565
        %651 = vmatpush.msra.mxu0 %v563
        %652 = vmatpush.msra.mxu0 %v561
        %653 = vmatpush.msra.mxu0 %v559
        %654 = vmatpush.msra.mxu0 %v557
        %655 = vmatpush.msra.mxu0 %v555
        %656 = vmatpush.msra.mxu0 %v553
        %657 = vmatpush.msra.mxu0 %v551
        %658 = vmatpush.msra.mxu0 %v549
        %659 = vmatpush.msra.mxu0 %v547
        %660 = vmatpush.msra.mxu0 %v545
        %661 = vmatpush.msra.mxu0 %v543
        %662 = vmatmul.f32.gmra.mxu0 %v534
        %v663 = vpop.f32.mrf.mxu0
        %v664 = vadd.f32 0.0, %v663
        %665 = vdwg.mxu0
        %666 = vmatpush.msra.mxu0 %v605
        %667 = vmatpush.msra.mxu0 %v603
        %668 = vmatpush.msra.mxu0 %v601
        %669 = vmatpush.msra.mxu0 %v599
        %670 = vmatpush.msra.mxu0 %v597
        %671 = vmatpush.msra.mxu0 %v595
        %672 = vmatpush.msra.mxu0 %v593
        %673 = vmatpush.msra.mxu0 %v591
        %674 = vmatpush.msra.mxu0 %v589
        %675 = vmatpush.msra.mxu0 %v587
        %676 = vmatpush.msra.mxu0 %v585
        %677 = vmatpush.msra.mxu0 %v583
        %678 = vmatpush.msra.mxu0 %v581
        %679 = vmatpush.msra.mxu0 %v579
        %680 = vmatpush.msra.mxu0 %v577
        %681 = vmatpush.msra.mxu0 %v575
        %682 = vmatmul.f32.gmra.mxu0 %v535
        %v683 = vpop.f32.mrf.mxu0
        %v684 = vadd.f32 %v664, %v683
        %685 = vdwg.mxu0
        %v686 = vand.u32 %v353, 7
        %vm687 = vcmp.eq.s32.totalorder %v686, 7
        %v688 = vsel %vm687, 0.0, 1.0
        %vm689 = vcmp.eq.s32.totalorder %v686, 0
        %v690 = vsel %vm689, 0.0, 1.0
        %v691 = vmul.f32 %v644, %v688
        %v692 = vmul.f32 %v644, %v690
        %694 = vrot.lane.b32.xlu0 %v691, 9
        %v695 = vpop.permute.xlu0 %694
        %vm697 = vcmask 72704
        %v698 = vsel %vm697, 0.0, %v695
        %700 = vrot.lane.b32.xlu0 %v644, 8
        %v701 = vpop.permute.xlu0 %700
        %vm703 = vcmask 64512
        %v704 = vsel %vm703, 0.0, %v701
        %706 = vrot.lane.b32.xlu0 %v692, 7
        %v707 = vpop.permute.xlu0 %706
        %vm709 = vcmask 56320
        %v710 = vsel %vm709, 0.0, %v707
        %711 = vrot.lane.b32.xlu0 %v691, 1
        %v712 = vpop.permute.xlu0 %711
        %v714 = vsel %vm405, 0.0, %v712
        %715 = vrot.lane.b32.xlu0 %v692, 127
        %v716 = vpop.permute.xlu0 %715
        %vm718 = vcmask 515072
        %v719 = vsel %vm718, %v716, 0.0
        %720 = vrot.lane.b32.xlu0 %v691, 121
        %v721 = vpop.permute.xlu0 %720
        %vm723 = vcmask 465920
        %v724 = vsel %vm723, %v721, 0.0
        %725 = vrot.lane.b32.xlu0 %v644, 120
        %v726 = vpop.permute.xlu0 %725
        %vm728 = vcmask 457728
        %v729 = vsel %vm728, %v726, 0.0
        %730 = vrot.lane.b32.xlu0 %v692, 119
        %v731 = vpop.permute.xlu0 %730
        %vm733 = vcmask 449536
        %v734 = vsel %vm733, %v731, 0.0
        %v736 = vrot.slane %v704, 4
        %v739 = vrot.slane %v714, 4
        %v742 = vrot.slane %v719, 4
        %v745 = vrot.slane %v729, 4
        %v747 = vsel %vm292, %v698, %v736
        %v748 = vsel %vm292, %v710, %v739
        %v749 = vsel %vm292, %v644, %v742
        %v750 = vsel %vm292, %v724, %v745
        %752 = vrot.lane.b32.xlu0 %v688, 64
        %v753 = vpop.permute.xlu0 %752
        %v755 = vmul.f32 %v644, %v753
        %757 = vrot.lane.b32.xlu0 %v690, 64
        %v758 = vpop.permute.xlu0 %757
        %v760 = vmul.f32 %v644, %v758
        %762 = vrot.lane.b32.xlu0 %v755, 73
        %v763 = vpop.permute.xlu0 %762
        %v765 = vsel %vm697, 0.0, %v763
        %766 = vrot.lane.b32.xlu0 %v644, 72
        %v767 = vpop.permute.xlu0 %766
        %v769 = vsel %vm703, 0.0, %v767
        %771 = vrot.lane.b32.xlu0 %v760, 71
        %v772 = vpop.permute.xlu0 %771
        %v774 = vsel %vm709, 0.0, %v772
        %775 = vrot.lane.b32.xlu0 %v755, 65
        %v776 = vpop.permute.xlu0 %775
        %v778 = vsel %vm405, 0.0, %v776
        %779 = vrot.lane.b32.xlu0 %v760, 63
        %v780 = vpop.permute.xlu0 %779
        %v782 = vsel %vm718, %v780, 0.0
        %783 = vrot.lane.b32.xlu0 %v755, 57
        %v784 = vpop.permute.xlu0 %783
        %v786 = vsel %vm723, %v784, 0.0
        %787 = vrot.lane.b32.xlu0 %v644, 56
        %v788 = vpop.permute.xlu0 %787
        %v790 = vsel %vm728, %v788, 0.0
        %791 = vrot.lane.b32.xlu0 %v760, 55
        %v792 = vpop.permute.xlu0 %791
        %v794 = vsel %vm733, %v792, 0.0
        %v796 = vrot.slane %v769, 4
        %v799 = vrot.slane %v778, 4
        %801 = vrot.lane.b32.xlu0 %v644, 64
        %v802 = vpop.permute.xlu0 %801
        %v805 = vrot.slane %v782, 4
        %v808 = vrot.slane %v790, 4
        %v810 = vsel %vm292, %v765, %v796
        %v811 = vsel %vm292, %v774, %v799
        %v812 = vsel %vm292, %v802, %v805
        %v813 = vsel %vm292, %v786, %v808
        %v814 = vmul.f32 %v684, %v688
        %v815 = vmul.f32 %v684, %v690
        %817 = vrot.lane.b32.xlu0 %v814, 9
        %v818 = vpop.permute.xlu0 %817
        %v820 = vsel %vm697, 0.0, %v818
        %822 = vrot.lane.b32.xlu0 %v684, 8
        %v823 = vpop.permute.xlu0 %822
        %v825 = vsel %vm703, 0.0, %v823
        %827 = vrot.lane.b32.xlu0 %v815, 7
        %v828 = vpop.permute.xlu0 %827
        %v830 = vsel %vm709, 0.0, %v828
        %831 = vrot.lane.b32.xlu0 %v814, 1
        %v832 = vpop.permute.xlu0 %831
        %v834 = vsel %vm405, 0.0, %v832
        %835 = vrot.lane.b32.xlu0 %v815, 127
        %v836 = vpop.permute.xlu0 %835
        %v838 = vsel %vm718, %v836, 0.0
        %839 = vrot.lane.b32.xlu0 %v814, 121
        %v840 = vpop.permute.xlu0 %839
        %v842 = vsel %vm723, %v840, 0.0
        %843 = vrot.lane.b32.xlu0 %v684, 120
        %v844 = vpop.permute.xlu0 %843
        %v846 = vsel %vm728, %v844, 0.0
        %847 = vrot.lane.b32.xlu0 %v815, 119
        %v848 = vpop.permute.xlu0 %847
        %v850 = vsel %vm733, %v848, 0.0
        %v852 = vrot.slane %v825, 4
        %v855 = vrot.slane %v834, 4
        %v858 = vrot.slane %v838, 4
        %v861 = vrot.slane %v846, 4
        %v863 = vsel %vm292, %v820, %v852
        %v864 = vsel %vm292, %v830, %v855
        %v865 = vsel %vm292, %v684, %v858
        %v866 = vsel %vm292, %v842, %v861
        %v867 = vmul.f32 %v684, %v753
        %v868 = vmul.f32 %v684, %v758
        %870 = vrot.lane.b32.xlu0 %v867, 73
        %v871 = vpop.permute.xlu0 %870
        %v873 = vsel %vm697, 0.0, %v871
        %874 = vrot.lane.b32.xlu0 %v684, 72
        %v875 = vpop.permute.xlu0 %874
        %v877 = vsel %vm703, 0.0, %v875
        %879 = vrot.lane.b32.xlu0 %v868, 71
        %v880 = vpop.permute.xlu0 %879
        %v882 = vsel %vm709, 0.0, %v880
        %883 = vrot.lane.b32.xlu0 %v867, 65
        %v884 = vpop.permute.xlu0 %883
        %v886 = vsel %vm405, 0.0, %v884
        %887 = vrot.lane.b32.xlu0 %v868, 63
        %v888 = vpop.permute.xlu0 %887
        %v890 = vsel %vm718, %v888, 0.0
        %891 = vrot.lane.b32.xlu0 %v867, 57
        %v892 = vpop.permute.xlu0 %891
        %v894 = vsel %vm723, %v892, 0.0
        %895 = vrot.lane.b32.xlu0 %v684, 56
        %v896 = vpop.permute.xlu0 %895
        %v898 = vsel %vm728, %v896, 0.0
        %899 = vrot.lane.b32.xlu0 %v868, 55
        %v900 = vpop.permute.xlu0 %899
        %v902 = vsel %vm733, %v900, 0.0
        %v904 = vrot.slane %v877, 4
        %v907 = vrot.slane %v886, 4
        %909 = vrot.lane.b32.xlu0 %v684, 64
        %v910 = vpop.permute.xlu0 %909
        %v913 = vrot.slane %v890, 4
        %v916 = vrot.slane %v898, 4
        %v918 = vsel %vm292, %v873, %v904
        %v919 = vsel %vm292, %v882, %v907
        %v920 = vsel %vm292, %v910, %v913
        %v921 = vsel %vm292, %v894, %v916
        %v922 = vld [vmem:[#allocation2 + $0x330] sm:$0xff]
        %v923 = vld [vmem:[#allocation2 + $0x338] sm:$0xff]
        %v929 = vrot.slane %v810, 4
        %v930 = vrot.slane %v811, 4
        %v931 = vsel %vm292, %v929, %v930
        %v932 = vrot.slane %v812, 4
        %v933 = vsel %vm292, %v930, %v932
        %v934 = vrot.slane %v813, 4
        %v935 = vsel %vm292, %v932, %v934
        %v936 = vrot.slane %v794, 4
        %v937 = vsel %vm292, %v934, %v936
        %v948 = vrot.slane %v918, 4
        %v949 = vrot.slane %v919, 4
        %v950 = vsel %vm292, %v948, %v949
        %v951 = vrot.slane %v920, 4
        %v952 = vsel %vm292, %v949, %v951
        %v953 = vrot.slane %v921, 4
        %v954 = vsel %vm292, %v951, %v953
        %v955 = vrot.slane %v902, 4
        %v956 = vsel %vm292, %v953, %v955
        %v962 = vsel %vm292, %v734, %v929
        %v963 = vsel %vm292, %v850, %v948
        %v965 = vsel %vm375, %v923, 0
        %vm967 = vcmask 1040384
        %v969 = vsel %vm967, 1.0, 0
        %971 = vmatpush.msra.mxu0 %v952
        %972 = vmatpush.msra.mxu0 %v950
        %973 = vmatpush.msra.mxu0 %v963
        %974 = vmatpush.msra.mxu0 %v866
        %975 = vmatpush.msra.mxu0 %v865
        %976 = vmatpush.msra.mxu0 %v864
        %977 = vmatpush.msra.mxu0 %v863
        %978 = vmatpush.msra.mxu0 %v937
        %979 = vmatpush.msra.mxu0 %v935
        %980 = vmatpush.msra.mxu0 %v933
        %981 = vmatpush.msra.mxu0 %v931
        %982 = vmatpush.msra.mxu0 %v962
        %983 = vmatpush.msra.mxu0 %v750
        %984 = vmatpush.msra.mxu0 %v749
        %985 = vmatpush.msra.mxu0 %v748
        %986 = vmatpush.msra.mxu0 %v747
        %987 = vmatmul.f32.gmra.mxu0 %v922
        %v988 = vpop.f32.mrf.mxu0
        %v989 = vadd.f32 0.0, %v988
        %990 = vdwg.mxu0
        %991 = vmatpush.msra.mxu0 0.0
        %992 = vmatpush.msra.mxu0 0.0
        %993 = vmatpush.msra.mxu0 0.0
        %994 = vmatpush.msra.mxu0 0.0
        %995 = vmatpush.msra.mxu0 0.0
        %996 = vmatpush.msra.mxu0 0.0
        %997 = vmatpush.msra.mxu0 0.0
        %998 = vmatpush.msra.mxu0 0.0
        %999 = vmatpush.msra.mxu0 0.0
        %1000 = vmatpush.msra.mxu0 0.0
        %1001 = vmatpush.msra.mxu0 0.0
        %1002 = vmatpush.msra.mxu0 0.0
        %1003 = vmatpush.msra.mxu0 0.0
        %1004 = vmatpush.msra.mxu0 %v969
        %1005 = vmatpush.msra.mxu0 %v956
        %1006 = vmatpush.msra.mxu0 %v954
        %1007 = vmatmul.f32.gmra.mxu0 %v965
        %v1008 = vpop.f32.mrf.mxu0
        %v1009 = vadd.f32 %v989, %v1008
        %1010 = vdwg.mxu0
        %vm1011 = vcmp.ge.f32.partialorder %v1009, 0.0
        %v1012 = vmul.f32 %v1009, 0.2
        %v1013 = vsel %vm1011, %v1009, %v1012
        %v1014 = vmul.f32 %v1013, 1.4142135
        %v1015 = vmax.f32 %v1014, -256.0
        %v1016 = vmin.f32 %v1015, 256.0
        %v1017 = vld [vmem:[#allocation2 + $0x348] sm:$0xff]
        %v1018 = vmul.f32 %v1016, %v688
        %v1019 = vmul.f32 %v1016, %v690
        %1021 = vrot.lane.b32.xlu0 %v1018, 9
        %v1022 = vpop.permute.xlu0 %1021
        %v1024 = vsel %vm697, 0.0, %v1022
        %1026 = vrot.lane.b32.xlu0 %v1016, 8
        %v1027 = vpop.permute.xlu0 %1026
        %v1029 = vsel %vm703, 0.0, %v1027
        %1031 = vrot.lane.b32.xlu0 %v1019, 7
        %v1032 = vpop.permute.xlu0 %1031
        %v1034 = vsel %vm709, 0.0, %v1032
        %1035 = vrot.lane.b32.xlu0 %v1018, 1
        %v1036 = vpop.permute.xlu0 %1035
        %v1038 = vsel %vm405, 0.0, %v1036
        %1039 = vrot.lane.b32.xlu0 %v1019, 127
        %v1040 = vpop.permute.xlu0 %1039
        %v1042 = vsel %vm718, %v1040, 0.0
        %1043 = vrot.lane.b32.xlu0 %v1018, 121
        %v1044 = vpop.permute.xlu0 %1043
        %v1046 = vsel %vm723, %v1044, 0.0
        %1047 = vrot.lane.b32.xlu0 %v1016, 120
        %v1048 = vpop.permute.xlu0 %1047
        %v1050 = vsel %vm728, %v1048, 0.0
        %1051 = vrot.lane.b32.xlu0 %v1019, 119
        %v1052 = vpop.permute.xlu0 %1051
        %v1054 = vsel %vm733, %v1052, 0.0
        %vm1055 = vcmask 596992
        %v1057 = vsel %vm1055, %v1017, 0
        %1059 = vmatpush.msra.mxu0 0.0
        %1060 = vmatpush.msra.mxu0 0.0
        %1061 = vmatpush.msra.mxu0 0.0
        %1062 = vmatpush.msra.mxu0 0.0
        %1063 = vmatpush.msra.mxu0 0.0
        %1064 = vmatpush.msra.mxu0 0.0
        %1065 = vmatpush.msra.mxu0 %v969
        %1066 = vmatpush.msra.mxu0 %v1054
        %1067 = vmatpush.msra.mxu0 %v1050
        %1068 = vmatpush.msra.mxu0 %v1046
        %1069 = vmatpush.msra.mxu0 %v1042
        %1070 = vmatpush.msra.mxu0 %v1016
        %1071 = vmatpush.msra.mxu0 %v1038
        %1072 = vmatpush.msra.mxu0 %v1034
        %1073 = vmatpush.msra.mxu0 %v1029
        %1074 = vmatpush.msra.mxu0 %v1024
        %1075 = vmatmul.f32.gmra.mxu0 %v1057
        %v1076 = vpop.f32.mrf.mxu0
        %v1077 = vadd.f32 0.0, %v1076
        %1078 = vdwg.mxu0
        %vm1079 = vcmp.ge.f32.partialorder %v1077, 0.0
        %v1080 = vmul.f32 %v1077, 0.2
        %v1081 = vsel %vm1079, %v1077, %v1080
        %v1082 = vmul.f32 %v1081, 1.4142135
        %v1083 = vmax.f32 %v1082, -256.0
        %v1084 = vmin.f32 %v1083, 256.0
        %vm1085 = vcmask 523264
        %1086 = vst.msk [vmem:[%s271] sm:$0xff] %vm1085, %v1084
        %v1087 = vld [vmem:[#allocation2 + $0x360] sm:$0xff]
        %v1088 = vld [vmem:[#allocation2 + $0x378] sm:$0xff]
        %v1089 = vld [vmem:[#allocation2 + $0x390] sm:$0xff]
        %v1090 = vld [vmem:[#allocation2 + $0x3a8] sm:$0xff]
        %v1091 = vld [vmem:[#allocation2 + $0x3c0] sm:$0xff]
        %v1092 = vld [vmem:[#allocation2 + $0x3d8] sm:$0xff]
        %v1093 = vld [vmem:[#allocation2 + $0x3f0] sm:$0xff]
        %v1094 = vld [vmem:[#allocation2 + $0x408] sm:$0xff]
        %v1096 = vsel %vm1085, %v1084, 0
        %1098 = vmatpush.msra.mxu0 0.0
        %1099 = vmatpush.msra.mxu0 0.0
        %1100 = vmatpush.msra.mxu0 0.0
        %1101 = vmatpush.msra.mxu0 0.0
        %1102 = vmatpush.msra.mxu0 0.0
        %1103 = vmatpush.msra.mxu0 0.0
        %1104 = vmatpush.msra.mxu0 0.0
        %1105 = vmatpush.msra.mxu0 0.0
        %1106 = vmatpush.msra.mxu0 %v1094
        %1107 = vmatpush.msra.mxu0 %v1093
        %1108 = vmatpush.msra.mxu0 %v1092
        %1109 = vmatpush.msra.mxu0 %v1091
        %1110 = vmatpush.msra.mxu0 %v1090
        %1111 = vmatpush.msra.mxu0 %v1089
        %1112 = vmatpush.msra.mxu0 %v1088
        %1113 = vmatpush.msra.mxu0 %v1087
        %1114 = vmatmul.f32.gmra.mxu0 %v1096
        %v1115 = vpop.f32.mrf.mxu0
        %v1116 = vadd.f32 0.0, %v1115
        %1117 = vdwg.mxu0
        %v1118 = vand.u32 %v353, 3
        %vm1119 = vcmp.eq.s32.totalorder %v1118, 3
        %v1120 = vsel %vm1119, 0.0, 1.0
        %vm1121 = vcmp.eq.s32.totalorder %v1118, 0
        %v1122 = vsel %vm1121, 0.0, 1.0
        %v1123 = vmul.f32 %v1116, %v1120
        %v1124 = vmul.f32 %v1116, %v1122
        %1126 = vrot.lane.b32.xlu0 %v1123, 5
        %v1127 = vpop.permute.xlu0 %1126
        %vm1129 = vcmask 39936
        %v1130 = vsel %vm1129, 0.0, %v1127
        %1132 = vrot.lane.b32.xlu0 %v1116, 4
        %v1133 = vpop.permute.xlu0 %1132
        %v1135 = vsel %vm288, 0.0, %v1133
        %1137 = vrot.lane.b32.xlu0 %v1124, 3
        %v1138 = vpop.permute.xlu0 %1137
        %vm1140 = vcmask 23552
        %v1141 = vsel %vm1140, 0.0, %v1138
        %1142 = vrot.lane.b32.xlu0 %v1123, 1
        %v1143 = vpop.permute.xlu0 %1142
        %v1145 = vsel %vm405, 0.0, %v1143
        %1146 = vrot.lane.b32.xlu0 %v1124, 127
        %v1147 = vpop.permute.xlu0 %1146
        %v1149 = vsel %vm396, %v1147, 0.0
        %1150 = vrot.lane.b32.xlu0 %v1123, 125
        %v1151 = vpop.permute.xlu0 %1150
        %vm1153 = vcmask 105472
        %v1154 = vsel %vm1153, %v1151, 0.0
        %1155 = vrot.lane.b32.xlu0 %v1116, 124
        %v1156 = vpop.permute.xlu0 %1155
        %vm1158 = vcmask 97280
        %v1159 = vsel %vm1158, %v1156, 0.0
        %1160 = vrot.lane.b32.xlu0 %v1124, 123
        %v1161 = vpop.permute.xlu0 %1160
        %vm1163 = vcmask 89088
        %v1164 = vsel %vm1163, %v1161, 0.0
        %1166 = vrot.lane.b32.xlu0 %v1120, 16
        %v1167 = vpop.permute.xlu0 %1166
        %v1169 = vmul.f32 %v1116, %v1167
        %1171 = vrot.lane.b32.xlu0 %v1122, 16
        %v1172 = vpop.permute.xlu0 %1171
        %v1174 = vmul.f32 %v1116, %v1172
        %1176 = vrot.lane.b32.xlu0 %v1169, 117
        %v1177 = vpop.permute.xlu0 %1176
        %v1179 = vsel %vm1129, 0.0, %v1177
        %1180 = vrot.lane.b32.xlu0 %v1116, 116
        %v1181 = vpop.permute.xlu0 %1180
        %v1183 = vsel %vm288, 0.0, %v1181
        %1185 = vrot.lane.b32.xlu0 %v1174, 115
        %v1186 = vpop.permute.xlu0 %1185
        %v1188 = vsel %vm1140, 0.0, %v1186
        %1189 = vrot.lane.b32.xlu0 %v1169, 113
        %v1190 = vpop.permute.xlu0 %1189
        %v1192 = vsel %vm405, 0.0, %v1190
        %1193 = vrot.lane.b32.xlu0 %v1174, 111
        %v1194 = vpop.permute.xlu0 %1193
        %v1196 = vsel %vm396, %v1194, 0.0
        %1197 = vrot.lane.b32.xlu0 %v1169, 109
        %v1198 = vpop.permute.xlu0 %1197
        %v1200 = vsel %vm1153, %v1198, 0.0
        %1201 = vrot.lane.b32.xlu0 %v1116, 108
        %v1202 = vpop.permute.xlu0 %1201
        %v1204 = vsel %vm1158, %v1202, 0.0
        %1205 = vrot.lane.b32.xlu0 %v1174, 107
        %v1206 = vpop.permute.xlu0 %1205
        %v1208 = vsel %vm1163, %v1206, 0.0
        %1209 = vrot.lane.b32.xlu0 %v1116, 112
        %v1210 = vpop.permute.xlu0 %1209
        %1212 = vrot.lane.b32.xlu0 %v1120, 32
        %v1213 = vpop.permute.xlu0 %1212
        %v1215 = vmul.f32 %v1116, %v1213
        %1216 = vrot.lane.b32.xlu0 %v1122, 32
        %v1217 = vpop.permute.xlu0 %1216
        %v1219 = vmul.f32 %v1116, %v1217
        %1221 = vrot.lane.b32.xlu0 %v1215, 101
        %v1222 = vpop.permute.xlu0 %1221
        %v1224 = vsel %vm1129, 0.0, %v1222
        %1225 = vrot.lane.b32.xlu0 %v1116, 100
        %v1226 = vpop.permute.xlu0 %1225
        %v1228 = vsel %vm288, 0.0, %v1226
        %1230 = vrot.lane.b32.xlu0 %v1219, 99
        %v1231 = vpop.permute.xlu0 %1230
        %v1233 = vsel %vm1140, 0.0, %v1231
        %1234 = vrot.lane.b32.xlu0 %v1215, 97
        %v1235 = vpop.permute.xlu0 %1234
        %v1237 = vsel %vm405, 0.0, %v1235
        %1238 = vrot.lane.b32.xlu0 %v1219, 95
        %v1239 = vpop.permute.xlu0 %1238
        %v1241 = vsel %vm396, %v1239, 0.0
        %1242 = vrot.lane.b32.xlu0 %v1215, 93
        %v1243 = vpop.permute.xlu0 %1242
        %v1245 = vsel %vm1153, %v1243, 0.0
        %1246 = vrot.lane.b32.xlu0 %v1116, 92
        %v1247 = vpop.permute.xlu0 %1246
        %v1249 = vsel %vm1158, %v1247, 0.0
        %1250 = vrot.lane.b32.xlu0 %v1219, 91
        %v1251 = vpop.permute.xlu0 %1250
        %v1253 = vsel %vm1163, %v1251, 0.0
        %1254 = vrot.lane.b32.xlu0 %v1116, 96
        %v1255 = vpop.permute.xlu0 %1254
        %1257 = vrot.lane.b32.xlu0 %v1120, 48
        %v1258 = vpop.permute.xlu0 %1257
        %v1260 = vmul.f32 %v1116, %v1258
        %1261 = vrot.lane.b32.xlu0 %v1122, 48
        %v1262 = vpop.permute.xlu0 %1261
        %v1264 = vmul.f32 %v1116, %v1262
        %1266 = vrot.lane.b32.xlu0 %v1260, 85
        %v1267 = vpop.permute.xlu0 %1266
        %v1269 = vsel %vm1129, 0.0, %v1267
        %1270 = vrot.lane.b32.xlu0 %v1116, 84
        %v1271 = vpop.permute.xlu0 %1270
        %v1273 = vsel %vm288, 0.0, %v1271
        %1275 = vrot.lane.b32.xlu0 %v1264, 83
        %v1276 = vpop.permute.xlu0 %1275
        %v1278 = vsel %vm1140, 0.0, %v1276
        %1279 = vrot.lane.b32.xlu0 %v1260, 81
        %v1280 = vpop.permute.xlu0 %1279
        %v1282 = vsel %vm405, 0.0, %v1280
        %1283 = vrot.lane.b32.xlu0 %v1264, 79
        %v1284 = vpop.permute.xlu0 %1283
        %v1286 = vsel %vm396, %v1284, 0.0
        %1287 = vrot.lane.b32.xlu0 %v1260, 77
        %v1288 = vpop.permute.xlu0 %1287
        %v1290 = vsel %vm1153, %v1288, 0.0
        %1291 = vrot.lane.b32.xlu0 %v1116, 76
        %v1292 = vpop.permute.xlu0 %1291
        %v1294 = vsel %vm1158, %v1292, 0.0
        %1295 = vrot.lane.b32.xlu0 %v1264, 75
        %v1296 = vpop.permute.xlu0 %1295
        %v1298 = vsel %vm1163, %v1296, 0.0
        %1299 = vrot.lane.b32.xlu0 %v1116, 80
        %v1300 = vpop.permute.xlu0 %1299
        %v1302 = vld [vmem:[#allocation2 + $0x420] sm:$0xff]
        %v1303 = vld [vmem:[#allocation2 + $0x428] sm:$0xff]
        %v1304 = vld [vmem:[#allocation2 + $0x430] sm:$0xff]
        %v1305 = vld [vmem:[#allocation2 + $0x438] sm:$0xff]
        %v1306 = vld [vmem:[#allocation2 + $0x440] sm:$0xff]
        %v1307 = vld [vmem:[#allocation2 + $0x448] sm:$0xff]
        %vm1308 = vcmask 269312
        %v1310 = vsel %vm1308, %v1304, 0
        %v1313 = vsel %vm1308, %v1307, 0
        %1315 = vmatpush.msra.mxu0 %v1200
        %1316 = vmatpush.msra.mxu0 %v1196
        %1317 = vmatpush.msra.mxu0 %v1210
        %1318 = vmatpush.msra.mxu0 %v1192
        %1319 = vmatpush.msra.mxu0 %v1188
        %1320 = vmatpush.msra.mxu0 %v1183
        %1321 = vmatpush.msra.mxu0 %v1179
        %1322 = vmatpush.msra.mxu0 %v1164
        %1323 = vmatpush.msra.mxu0 %v1159
        %1324 = vmatpush.msra.mxu0 %v1154
        %1325 = vmatpush.msra.mxu0 %v1149
        %1326 = vmatpush.msra.mxu0 %v1116
        %1327 = vmatpush.msra.mxu0 %v1145
        %1328 = vmatpush.msra.mxu0 %v1141
        %1329 = vmatpush.msra.mxu0 %v1135
        %1330 = vmatpush.msra.mxu0 %v1130
        %1331 = vmatmul.f32.gmra.mxu0 %v1302
        %v1332 = vpop.f32.mrf.mxu0
        %v1333 = vadd.f32 0.0, %v1332
        %1334 = vmatmul.f32.gmra.mxu0 %v1305
        %v1335 = vpop.f32.mrf.mxu0
        %v1336 = vadd.f32 0.0, %v1335
        %1337 = vdwg.mxu0
        %1338 = vmatpush.msra.mxu0 %v1300
        %1339 = vmatpush.msra.mxu0 %v1282
        %1340 = vmatpush.msra.mxu0 %v1278
        %1341 = vmatpush.msra.mxu0 %v1273
        %1342 = vmatpush.msra.mxu0 %v1269
        %1343 = vmatpush.msra.mxu0 %v1253
        %1344 = vmatpush.msra.mxu0 %v1249
        %1345 = vmatpush.msra.mxu0 %v1245
        %1346 = vmatpush.msra.mxu0 %v1241
        %1347 = vmatpush.msra.mxu0 %v1255
        %1348 = vmatpush.msra.mxu0 %v1237
        %1349 = vmatpush.msra.mxu0 %v1233
        %1350 = vmatpush.msra.mxu0 %v1228
        %1351 = vmatpush.msra.mxu0 %v1224
        %1352 = vmatpush.msra.mxu0 %v1208
        %1353 = vmatpush.msra.mxu0 %v1204
        %1354 = vmatmul.f32.gmra.mxu0 %v1303
        %v1355 = vpop.f32.mrf.mxu0
        %v1356 = vadd.f32 %v1333, %v1355
        %1357 = vmatmul.f32.gmra.mxu0 %v1306
        %v1358 = vpop.f32.mrf.mxu0
        %v1359 = vadd.f32 %v1336, %v1358
        %1360 = vdwg.mxu0
        %1361 = vmatpush.msra.mxu0 0.0
        %1362 = vmatpush.msra.mxu0 0.0
        %1363 = vmatpush.msra.mxu0 0.0
        %1364 = vmatpush.msra.mxu0 0.0
        %1365 = vmatpush.msra.mxu0 0.0
        %1366 = vmatpush.msra.mxu0 0.0
        %1367 = vmatpush.msra.mxu0 0.0
        %1368 = vmatpush.msra.mxu0 0.0
        %1369 = vmatpush.msra.mxu0 0.0
        %1370 = vmatpush.msra.mxu0 0.0
        %1371 = vmatpush.msra.mxu0 0.0
        %1372 = vmatpush.msra.mxu0 %v969
        %1373 = vmatpush.msra.mxu0 %v1298
        %1374 = vmatpush.msra.mxu0 %v1294
        %1375 = vmatpush.msra.mxu0 %v1290
        %1376 = vmatpush.msra.mxu0 %v1286
        %1377 = vmatmul.f32.gmra.mxu0 %v1310
        %v1378 = vpop.f32.mrf.mxu0
        %v1379 = vadd.f32 %v1356, %v1378
        %1380 = vmatmul.f32.gmra.mxu0 %v1313
        %v1381 = vpop.f32.mrf.mxu0
        %v1382 = vadd.f32 %v1359, %v1381
        %1383 = vdwg.mxu0
        %vm1384 = vcmp.ge.f32.partialorder %v1379, 0.0
        %vm1385 = vcmp.ge.f32.partialorder %v1382, 0.0
        %v1386 = vmul.f32 %v1379, 0.2
        %v1387 = vmul.f32 %v1382, 0.2
        %v1388 = vsel %vm1384, %v1379, %v1386
        %v1389 = vsel %vm1385, %v1382, %v1387
        %v1390 = vmul.f32 %v1388, 1.4142135
        %v1391 = vmul.f32 %v1389, 1.4142135
        %v1392 = vmax.f32 %v1390, -256.0
        %v1393 = vmax.f32 %v1391, -256.0
        %v1394 = vmin.f32 %v1392, 256.0
        %v1395 = vmin.f32 %v1393, 256.0
        %v1396 = vld [vmem:[#allocation2 + $0x450] sm:$0xff]
        %v1397 = vld [vmem:[#allocation2 + $0x458] sm:$0xff]
        %v1398 = vld [vmem:[#allocation2 + $0x468] sm:$0xff]
        %v1399 = vld [vmem:[#allocation2 + $0x470] sm:$0xff]
        %v1400 = vmul.f32 %v1394, %v1120
        %v1401 = vmul.f32 %v1395, %v1120
        %v1402 = vmul.f32 %v1394, %v1122
        %v1403 = vmul.f32 %v1395, %v1122
        %1406 = vrot.lane.b32.xlu0 %v1400, 5
        %v1407 = vpop.permute.xlu0 %1406
        %1408 = vrot.lane.b32.xlu0 %v1401, 5
        %v1409 = vpop.permute.xlu0 %1408
        %v1412 = vsel %vm1129, 0.0, %v1407
        %v1413 = vsel %vm1129, 0.0, %v1409
        %1416 = vrot.lane.b32.xlu0 %v1394, 4
        %v1417 = vpop.permute.xlu0 %1416
        %1418 = vrot.lane.b32.xlu0 %v1395, 4
        %v1419 = vpop.permute.xlu0 %1418
        %v1422 = vsel %vm288, 0.0, %v1417
        %v1423 = vsel %vm288, 0.0, %v1419
        %1426 = vrot.lane.b32.xlu0 %v1402, 3
        %v1427 = vpop.permute.xlu0 %1426
        %1428 = vrot.lane.b32.xlu0 %v1403, 3
        %v1429 = vpop.permute.xlu0 %1428
        %v1432 = vsel %vm1140, 0.0, %v1427
        %v1433 = vsel %vm1140, 0.0, %v1429
        %1434 = vrot.lane.b32.xlu0 %v1400, 1
        %v1435 = vpop.permute.xlu0 %1434
        %1436 = vrot.lane.b32.xlu0 %v1401, 1
        %v1437 = vpop.permute.xlu0 %1436
        %v1440 = vsel %vm405, 0.0, %v1435
        %v1441 = vsel %vm405, 0.0, %v1437
        %1442 = vrot.lane.b32.xlu0 %v1402, 127
        %v1443 = vpop.permute.xlu0 %1442
        %1444 = vrot.lane.b32.xlu0 %v1403, 127
        %v1445 = vpop.permute.xlu0 %1444
        %v1448 = vsel %vm396, %v1443, 0.0
        %v1449 = vsel %vm396, %v1445, 0.0
        %1450 = vrot.lane.b32.xlu0 %v1400, 125
        %v1451 = vpop.permute.xlu0 %1450
        %1452 = vrot.lane.b32.xlu0 %v1401, 125
        %v1453 = vpop.permute.xlu0 %1452
        %v1456 = vsel %vm1153, %v1451, 0.0
        %v1457 = vsel %vm1153, %v1453, 0.0
        %1458 = vrot.lane.b32.xlu0 %v1394, 124
        %v1459 = vpop.permute.xlu0 %1458
        %1460 = vrot.lane.b32.xlu0 %v1395, 124
        %v1461 = vpop.permute.xlu0 %1460
        %v1464 = vsel %vm1158, %v1459, 0.0
        %v1465 = vsel %vm1158, %v1461, 0.0
        %1466 = vrot.lane.b32.xlu0 %v1402, 123
        %v1467 = vpop.permute.xlu0 %1466
        %1468 = vrot.lane.b32.xlu0 %v1403, 123
        %v1469 = vpop.permute.xlu0 %1468
        %v1472 = vsel %vm1163, %v1467, 0.0
        %v1473 = vsel %vm1163, %v1469, 0.0
        %v1475 = vsel %vm375, %v1397, 0
        %v1478 = vsel %vm375, %v1399, 0
        %1480 = vmatpush.msra.mxu0 %v1465
        %1481 = vmatpush.msra.mxu0 %v1464
        %1482 = vmatpush.msra.mxu0 %v1457
        %1483 = vmatpush.msra.mxu0 %v1456
        %1484 = vmatpush.msra.mxu0 %v1449
        %1485 = vmatpush.msra.mxu0 %v1448
        %1486 = vmatpush.msra.mxu0 %v1395
        %1487 = vmatpush.msra.mxu0 %v1394
        %1488 = vmatpush.msra.mxu0 %v1441
        %1489 = vmatpush.msra.mxu0 %v1440
        %1490 = vmatpush.msra.mxu0 %v1433
        %1491 = vmatpush.msra.mxu0 %v1432
        %1492 = vmatpush.msra.mxu0 %v1423
        %1493 = vmatpush.msra.mxu0 %v1422
        %1494 = vmatpush.msra.mxu0 %v1413
        %1495 = vmatpush.msra.mxu0 %v1412
        %1496 = vmatmul.f32.gmra.mxu0 %v1396
        %v1497 = vpop.f32.mrf.mxu0
        %v1498 = vadd.f32 0.0, %v1497
        %1499 = vmatmul.f32.gmra.mxu0 %v1398
        %v1500 = vpop.f32.mrf.mxu0
        %v1501 = vadd.f32 0.0, %v1500
        %1502 = vdwg.mxu0
        %1503 = vmatpush.msra.mxu0 0.0
        %1504 = vmatpush.msra.mxu0 0.0
        %1505 = vmatpush.msra.mxu0 0.0
        %1506 = vmatpush.msra.mxu0 0.0
        %1507 = vmatpush.msra.mxu0 0.0
        %1508 = vmatpush.msra.mxu0 0.0
        %1509 = vmatpush.msra.mxu0 0.0
        %1510 = vmatpush.msra.mxu0 0.0
        %1511 = vmatpush.msra.mxu0 0.0
        %1512 = vmatpush.msra.mxu0 0.0
        %1513 = vmatpush.msra.mxu0 0.0
        %1514 = vmatpush.msra.mxu0 0.0
        %1515 = vmatpush.msra.mxu0 0.0
        %1516 = vmatpush.msra.mxu0 %v969
        %1517 = vmatpush.msra.mxu0 %v1473
        %1518 = vmatpush.msra.mxu0 %v1472
        %1519 = vmatmul.f32.gmra.mxu0 %v1475
        %v1520 = vpop.f32.mrf.mxu0
        %v1521 = vadd.f32 %v1498, %v1520
        %1522 = vmatmul.f32.gmra.mxu0 %v1478
        %v1523 = vpop.f32.mrf.mxu0
        %v1524 = vadd.f32 %v1501, %v1523
        %1525 = vdwg.mxu0
        %vm1526 = vcmp.ge.f32.partialorder %v1521, 0.0
        %vm1527 = vcmp.ge.f32.partialorder %v1524, 0.0
        %v1528 = vmul.f32 %v1521, 0.2
        %v1529 = vmul.f32 %v1524, 0.2
        %v1530 = vsel %vm1526, %v1521, %v1528
        %v1531 = vsel %vm1527, %v1524, %v1529
        %v1532 = vmul.f32 %v1530, 1.4142135
        %v1533 = vmul.f32 %v1531, 1.4142135
        %v1534 = vmax.f32 %v1532, -256.0
        %v1535 = vmax.f32 %v1533, -256.0
        %v1536 = vmin.f32 %v1534, 256.0
        %v1537 = vmin.f32 %v1535, 256.0
        %1538 = vst.msk [vmem:[%s276] sm:$0xff] %vm386, %v1536
        %1539 = vst.msk [vmem:[%s276 + $0x8] sm:$0xff] %vm386, %v1537
        %v1540 = vld [vmem:[#allocation2 + $0x480] sm:$0xff]
        %v1541 = vld [vmem:[#allocation2 + $0x488] sm:$0xff]
        %v1542 = vld [vmem:[#allocation2 + $0x498] sm:$0xff]
        %v1543 = vld [vmem:[#allocation2 + $0x4a0] sm:$0xff]
        %v1544 = vmul.f32 %v1536, %v1120
        %v1545 = vmul.f32 %v1537, %v1120
        %v1546 = vmul.f32 %v1536, %v1122
        %v1547 = vmul.f32 %v1537, %v1122
        %1550 = vrot.lane.b32.xlu0 %v1544, 5
        %v1551 = vpop.permute.xlu0 %1550
        %1552 = vrot.lane.b32.xlu0 %v1545, 5
        %v1553 = vpop.permute.xlu0 %1552
        %v1556 = vsel %vm1129, 0.0, %v1551
        %v1557 = vsel %vm1129, 0.0, %v1553
        %1560 = vrot.lane.b32.xlu0 %v1536, 4
        %v1561 = vpop.permute.xlu0 %1560
        %1562 = vrot.lane.b32.xlu0 %v1537, 4
        %v1563 = vpop.permute.xlu0 %1562
        %v1566 = vsel %vm288, 0.0, %v1561
        %v1567 = vsel %vm288, 0.0, %v1563
        %1570 = vrot.lane.b32.xlu0 %v1546, 3
        %v1571 = vpop.permute.xlu0 %1570
        %1572 = vrot.lane.b32.xlu0 %v1547, 3
        %v1573 = vpop.permute.xlu0 %1572
        %v1576 = vsel %vm1140, 0.0, %v1571
        %v1577 = vsel %vm1140, 0.0, %v1573
        %1578 = vrot.lane.b32.xlu0 %v1544, 1
        %v1579 = vpop.permute.xlu0 %1578
        %1580 = vrot.lane.b32.xlu0 %v1545, 1
        %v1581 = vpop.permute.xlu0 %1580
        %v1584 = vsel %vm405, 0.0, %v1579
        %v1585 = vsel %vm405, 0.0, %v1581
        %1586 = vrot.lane.b32.xlu0 %v1546, 127
        %v1587 = vpop.permute.xlu0 %1586
        %1588 = vrot.lane.b32.xlu0 %v1547, 127
        %v1589 = vpop.permute.xlu0 %1588
        %v1592 = vsel %vm396, %v1587, 0.0
        %v1593 = vsel %vm396, %v1589, 0.0
        %1594 = vrot.lane.b32.xlu0 %v1544, 125
        %v1595 = vpop.permute.xlu0 %1594
        %1596 = vrot.lane.b32.xlu0 %v1545, 125
        %v1597 = vpop.permute.xlu0 %1596
        %v1600 = vsel %vm1153, %v1595, 0.0
        %v1601 = vsel %vm1153, %v1597, 0.0
        %1602 = vrot.lane.b32.xlu0 %v1536, 124
        %v1603 = vpop.permute.xlu0 %1602
        %1604 = vrot.lane.b32.xlu0 %v1537, 124
        %v1605 = vpop.permute.xlu0 %1604
        %v1608 = vsel %vm1158, %v1603, 0.0
        %v1609 = vsel %vm1158, %v1605, 0.0
        %1610 = vrot.lane.b32.xlu0 %v1546, 123
        %v1611 = vpop.permute.xlu0 %1610
        %1612 = vrot.lane.b32.xlu0 %v1547, 123
        %v1613 = vpop.permute.xlu0 %1612
        %v1616 = vsel %vm1163, %v1611, 0.0
        %v1617 = vsel %vm1163, %v1613, 0.0
        %v1619 = vsel %vm375, %v1541, 0
        %v1622 = vsel %vm375, %v1543, 0
        %1624 = vmatpush.msra.mxu0 %v1609
        %1625 = vmatpush.msra.mxu0 %v1608
        %1626 = vmatpush.msra.mxu0 %v1601
        %1627 = vmatpush.msra.mxu0 %v1600
        %1628 = vmatpush.msra.mxu0 %v1593
        %1629 = vmatpush.msra.mxu0 %v1592
        %1630 = vmatpush.msra.mxu0 %v1537
        %1631 = vmatpush.msra.mxu0 %v1536
        %1632 = vmatpush.msra.mxu0 %v1585
        %1633 = vmatpush.msra.mxu0 %v1584
        %1634 = vmatpush.msra.mxu0 %v1577
        %1635 = vmatpush.msra.mxu0 %v1576
        %1636 = vmatpush.msra.mxu0 %v1567
        %1637 = vmatpush.msra.mxu0 %v1566
        %1638 = vmatpush.msra.mxu0 %v1557
        %1639 = vmatpush.msra.mxu0 %v1556
        %1640 = vmatmul.f32.gmra.mxu0 %v1540
        %v1641 = vpop.f32.mrf.mxu0
        %v1642 = vadd.f32 0.0, %v1641
        %1643 = vmatmul.f32.gmra.mxu0 %v1542
        %v1644 = vpop.f32.mrf.mxu0
        %v1645 = vadd.f32 0.0, %v1644
        %1646 = vdwg.mxu0
        %1647 = vmatpush.msra.mxu0 0.0
        %1648 = vmatpush.msra.mxu0 0.0
        %1649 = vmatpush.msra.mxu0 0.0
        %1650 = vmatpush.msra.mxu0 0.0
        %1651 = vmatpush.msra.mxu0 0.0
        %1652 = vmatpush.msra.mxu0 0.0
        %1653 = vmatpush.msra.mxu0 0.0
        %1654 = vmatpush.msra.mxu0 0.0
        %1655 = vmatpush.msra.mxu0 0.0
        %1656 = vmatpush.msra.mxu0 0.0
        %1657 = vmatpush.msra.mxu0 0.0
        %1658 = vmatpush.msra.mxu0 0.0
        %1659 = vmatpush.msra.mxu0 0.0
        %1660 = vmatpush.msra.mxu0 %v969
        %1661 = vmatpush.msra.mxu0 %v1617
        %1662 = vmatpush.msra.mxu0 %v1616
        %1663 = vmatmul.f32.gmra.mxu0 %v1619
        %v1664 = vpop.f32.mrf.mxu0
        %v1665 = vadd.f32 %v1642, %v1664
        %1666 = vmatmul.f32.gmra.mxu0 %v1622
        %v1667 = vpop.f32.mrf.mxu0
        %v1668 = vadd.f32 %v1645, %v1667
        %1669 = vdwg.mxu0
        %vm1670 = vcmp.ge.f32.partialorder %v1665, 0.0
        %vm1671 = vcmp.ge.f32.partialorder %v1668, 0.0
        %v1672 = vmul.f32 %v1665, 0.2
        %v1673 = vmul.f32 %v1668, 0.2
        %v1674 = vsel %vm1670, %v1665, %v1672
        %v1675 = vsel %vm1671, %v1668, %v1673
        %v1676 = vmul.f32 %v1674, 1.4142135
        %v1677 = vmul.f32 %v1675, 1.4142135
        %v1678 = vmax.f32 %v1676, -256.0
        %v1679 = vmax.f32 %v1677, -256.0
        %v1680 = vmin.f32 %v1678, 256.0
        %v1681 = vmin.f32 %v1679, 256.0
        %1682 = vst.msk [vmem:[%s262] sm:$0xff] %vm386, %v1680
        %1683 = vst.msk [vmem:[%s262 + $0x8] sm:$0xff] %vm386, %v1681
        %p1684 = scmp.lt.s32.totalorder %s18, 1
        %s1685 = scalar_select %p1684, %s18, 1
        %s1686 = smul.addr %s1685, 2
        %s1687 = smul.addr %s1686, 8
        %s1688 = scalar_lea.vmem %s2, %s1687
        %p1689 = scmp.lt.s32.totalorder %s18, 1
        %s1690 = scalar_select %p1689, %s18, 1
        %s1691 = smul.addr %s1690, 2
        %s1692 = smul.addr %s1691, 4
        %s1693 = scalar_lea.vmem %s3, %s1692
        %p1694 = scmp.lt.s32.totalorder %s18, 1
        %s1695 = scalar_select %p1694, %s18, 1
        %s1696 = smul.addr %s1695, 8
        %s1697 = scalar_lea.vmem %s4, %s1696
        %p1698 = scmp.lt.s32.totalorder %s18, 1
        %s1699 = scalar_select %p1698, %s18, 1
        %s1700 = smul.addr %s1699, 2
        %s1701 = smul.addr %s1700, 8
        %s1702 = scalar_lea.vmem %s5, %s1701
        // Predicated region
        $region33: #{encoder_forward.1} parent=27 // pred_check
          %p1703 = pneg %p83
        $region34: #{encoder_forward.1} parent=27 // pred_check_branch
          %1705 = sbr.rel (%p1703) target = $region36
        $region35: #{encoder_forward.1} parent=27 // pred_region
          _
        $region36: #{encoder_forward.1} parent=27 // pred_fallthru
          _
        // Predicated region
        $region37: #{encoder_forward.1} parent=27 // pred_check
          %p1706 = pneg %p109
        $region38: #{encoder_forward.1} parent=27 // pred_check_branch
          %1708 = sbr.rel (%p1706) target = $region40
        $region39: #{encoder_forward.1} parent=27 // pred_region
          _
        $region40: #{encoder_forward.1} parent=27 // pred_fallthru
          _
        // Predicated region
        $region41: #{encoder_forward.1} parent=27 // pred_check
          %p1709 = pneg %p135
        $region42: #{encoder_forward.1} parent=27 // pred_check_branch
          %1711 = sbr.rel (%p1709) target = $region44
        $region43: #{encoder_forward.1} parent=27 // pred_region
          _
        $region44: #{encoder_forward.1} parent=27 // pred_fallthru
          _
        // Predicated region
        $region45: #{encoder_forward.1} parent=27 // pred_check
          %p1712 = pneg %p161
        $region46: #{encoder_forward.1} parent=27 // pred_check_branch
          %1714 = sbr.rel (%p1712) target = $region48
        $region47: #{encoder_forward.1} parent=27 // pred_region
          _
        $region48: #{encoder_forward.1} parent=27 // pred_fallthru
          _
      $region28: #{encoder_forward.1} parent=5 // pred_fallthru
        _
      %p1715 = scmp.le.s32.totalorder 2, %s13
      // Predicated region
      $region49: #{encoder_forward.1} parent=5 // pred_check
        %p1716 = pneg %p1715
      $region50: #{encoder_forward.1} parent=5 // pred_check_branch
        %1718 = sbr.rel (%p1716) target = $region52
      $region51: #{encoder_forward.1} parent=5 // pred_region
        %s1719 = ssub.s32 %s13, 2
        // Predicated region
        $region53: #{encoder_forward.1} parent=51 // pred_check
          %p1720 = pneg %p89
        $region54: #{encoder_forward.1} parent=51 // pred_check_branch
          %1722 = sbr.rel (%p1720) target = $region56
        $region55: #{encoder_forward.1} parent=51 // pred_region
          %p1723 = scmp.lt.s32.totalorder %s19, 1
          %s1724 = scalar_select %p1723, %s19, 1
          %s1725 = smul.addr %s1724, 2
          %s1726 = smul.addr %s1725, 8
          %s1727 = scalar_lea.vmem %s2, %s1726
        $region56: #{encoder_forward.1} parent=51 // pred_fallthru
          _
        // Predicated region
        $region57: #{encoder_forward.1} parent=51 // pred_check
          %p1728 = pneg %p115
        $region58: #{encoder_forward.1} parent=51 // pred_check_branch
          %1730 = sbr.rel (%p1728) target = $region60
        $region59: #{encoder_forward.1} parent=51 // pred_region
          %p1731 = scmp.lt.s32.totalorder %s19, 1
          %s1732 = scalar_select %p1731, %s19, 1
          %s1733 = smul.addr %s1732, 2
          %s1734 = smul.addr %s1733, 4
          %s1735 = scalar_lea.vmem %s3, %s1734
        $region60: #{encoder_forward.1} parent=51 // pred_fallthru
          _
        // Predicated region
        $region61: #{encoder_forward.1} parent=51 // pred_check
          %p1736 = pneg %p141
        $region62: #{encoder_forward.1} parent=51 // pred_check_branch
          %1738 = sbr.rel (%p1736) target = $region64
        $region63: #{encoder_forward.1} parent=51 // pred_region
          %p1739 = scmp.lt.s32.totalorder %s19, 1
          %s1740 = scalar_select %p1739, %s19, 1
          %s1741 = smul.addr %s1740, 8
          %s1742 = scalar_lea.vmem %s4, %s1741
        $region64: #{encoder_forward.1} parent=51 // pred_fallthru
          _
        // Predicated region
        $region65: #{encoder_forward.1} parent=51 // pred_check
          %p1743 = pneg %p167
        $region66: #{encoder_forward.1} parent=51 // pred_check_branch
          %1745 = sbr.rel (%p1743) target = $region68
        $region67: #{encoder_forward.1} parent=51 // pred_region
          %p1746 = scmp.lt.s32.totalorder %s19, 1
          %s1747 = scalar_select %p1746, %s19, 1
          %s1748 = smul.addr %s1747, 2
          %s1749 = smul.addr %s1748, 8
          %s1750 = scalar_lea.vmem %s5, %s1749
        $region68: #{encoder_forward.1} parent=51 // pred_fallthru
          _
      $region52: #{encoder_forward.1} parent=5 // pred_fallthru
        _
    $region6: #{encoder_forward.1} parent=1 // loop_footer
      %s17 = sadd.s32 1, %s13
    $region7: #{encoder_forward.1} parent=1 // loop_footer_branch
      %12 = sbr.rel target = $region3
    $region8: #{encoder_forward.1} parent=1 // loop_exit
      _
    %1751 = vsyncpa [#allocation3], 1
    %s1752 = scalar_lea.sflag [#allocation3], 1
    %1753 = vsyncpa %s1752, 1

</llo_original>
